<compile_context>
chip_gen: v6e
topology: v6e:2x2x1
jax: 0.10.0
libtpu: 0.0.40
codegen_flags: <defaults>
</compile_context>

<pallas_src>
import functools

import numpy as np

import jax
import jax.numpy as jnp
from jax.experimental import pallas as pl
from jax.experimental.pallas import tpu as pltpu

_MASK_VALUE = -1e30  # additive mask: equivalent to masked_fill(-f32.max) after softmax


def _attend_kernel(*refs, scale, has_bias, has_mask, softclamp, softclamp_value,
                   mm_dtype, exp_dtype, exact_recip):
    idx = 0
    q_ref = refs[idx]; idx += 1
    k_ref = refs[idx]; idx += 1
    v_ref = refs[idx]; idx += 1
    bias_ref = None
    mask_ref = None
    if has_bias:
        bias_ref = refs[idx]; idx += 1
    if has_mask:
        mask_ref = refs[idx]; idx += 1
    o_ref, qs_sc, m_sc, l_sc, acc_sc = refs[idx:idx + 5]

    ji = pl.program_id(3)

    @pl.when(ji == 0)
    def _():
        m_sc[...] = jnp.full_like(m_sc, -jnp.inf)
        l_sc[...] = jnp.zeros_like(l_sc)
        acc_sc[...] = jnp.zeros_like(acc_sc)
        # Scale Q once per (b, h, i) tile; it is resident across the whole j loop.
        # (Scale applied in the input dtype, matching the PyTorch module.)
        qs_sc[...] = (q_ref[...] * scale).astype(qs_sc.dtype)

    bb, hb, ib, dd = q_ref.shape
    jb = k_ref.shape[2]
    g = bb * hb  # leading-dims-only reshape: free (last two dims untouched)

    kk = k_ref[...].astype(mm_dtype).reshape(g, jb, dd)
    # s[g, i, j] = sum_d q[g, i, d] * k[g, j, d]   (f32 accumulation on the MXU)
    s = jnp.einsum('gid,gjd->gij', qs_sc[...].reshape(g, ib, dd), kk,
                   preferred_element_type=jnp.float32).reshape(bb, hb, ib, jb)

    if has_bias:
        s = s + bias_ref[...].astype(jnp.float32)   # broadcasts over broadcast bias axes

    if softclamp:
        # tanh in exp_dtype (bf16 on v6e/v7x) halves the extra EUP load of softclamp.
        t = jnp.tanh((s * (1.0 / softclamp_value)).astype(exp_dtype))
        s = softclamp_value * t.astype(jnp.float32)

    if has_mask:
        s = s + mask_ref[...].astype(jnp.float32)   # additive (0 keep / -1e30 drop)

    # --- online softmax over j ---
    m_prev = m_sc[...]
    m_new = jnp.maximum(m_prev, jnp.max(s, axis=-1, keepdims=True))
    alpha = jnp.exp(m_prev - m_new)
    # exp in exp_dtype (bf16 when allowed) -> EUP bf16 path; l accumulation stays f32.
    p = jnp.exp((s - m_new).astype(exp_dtype))
    l_sc[...] = alpha * l_sc[...] + jnp.sum(p, axis=-1, keepdims=True, dtype=jnp.float32)
    pv = jnp.einsum('gij,gjd->gid',
                    p.astype(mm_dtype).reshape(g, ib, jb),
                    v_ref[...].astype(mm_dtype).reshape(g, jb, dd),
                    preferred_element_type=jnp.float32).reshape(bb, hb, ib, dd)
    acc_sc[...] = alpha * acc_sc[...] + pv
    m_sc[...] = m_new

    @pl.when(ji == pl.num_programs(3) - 1)
    def _():
        if exact_recip:
            inv_l = 1.0 / l_sc[...]
        else:
            inv_l = pl.reciprocal(l_sc[...], approx=True)
        o_ref[...] = (acc_sc[...] * inv_l).astype(o_ref.dtype)


def _round_up(x, m):
    return ((x + m - 1) // m) * m


def _largest_divisor_leq(n, cap):
    cap = max(1, min(n, cap))
    while n % cap:
        cap -= 1
    return cap


def attend(q, k, v, mask=None, attn_bias=None, *, scale=None,
           enable_attn_softclamp=False, attn_softclamp_value=50.0,
           softmax_full_precision=False, matmul_dtype=None,
           i_block_target=512, j_block_target=512,
           vmem_budget_bytes=44 * 1024 * 1024):
    """Full attention (Attend.forward with window_size=None, no memory_kv, dropout=0).

    Notes:
      * attn_bias is streamed in the dtype it is passed in -> pass bf16 bias to halve the
        dominant HBM stream on AlphaFold-pair-style shapes; the kernel upcasts to f32.
      * pass `matmul_dtype=jnp.bfloat16` (or bf16 inputs) to run the MXU at bf16 rate.
    """
    b, h, i, d = q.shape
    j = k.shape[-2]
    if scale is None:
        scale = d ** -0.5

    in_dtype = np.dtype(q.dtype)
    mm_dtype = np.dtype(matmul_dtype) if matmul_dtype is not None else in_dtype
    bf16 = np.dtype(jnp.bfloat16)
    # bf16 transcendentals (EUP bf16 path on v6e/v7x) only when full-precision softmax was
    # not requested and the compute dtype is already bf16.
    use_bf16_exp = (not softmax_full_precision) and (in_dtype == bf16 or mm_dtype == bf16)
    exp_dtype = jnp.bfloat16 if use_bf16_exp else jnp.float32

    has_bias = attn_bias is not None
    bias4 = None
    bias_b_full = bias_h_full = False
    if has_bias:
        assert attn_bias.ndim <= 4
        bias4 = attn_bias.reshape((1,) * (4 - attn_bias.ndim) + attn_bias.shape)
        assert bias4.shape[-2:] == (i, j), "attn_bias trailing dims must be (i, j)"
        assert bias4.shape[0] in (1, b) and bias4.shape[1] in (1, h)
        bias_b_full = bias4.shape[0] == b
        bias_h_full = bias4.shape[1] == h

    # ---- block-size selection -------------------------------------------------------
    itemsize = in_dtype.itemsize
    sub_q = 8 * max(1, 4 // itemsize)          # dtype-aware sublane quantum: 8 f32, 16 bf16

    # Batch heads per grid step so h_blk * d >= 128 when the head dim is small.
    h_blk = 1
    if d < 128:
        h_blk = _largest_divisor_leq(h, max(1, 128 // d))

    # Batch-block only when the bias broadcasts over batch, so one bias tile DMA serves
    # b_blk batch elements of compute in a single grid step.
    b_blk = 1
    if has_bias and not bias_b_full and b > 1:
        b_blk = _largest_divisor_leq(b, 4)

    i_blk = i if i <= i_block_target else max(sub_q, (i_block_target // sub_q) * sub_q)
    j_blk = j if j <= j_block_target else max(128, (j_block_target // 128) * 128)

    mm_itemsize = mm_dtype.itemsize
    bias_itemsize = np.dtype(bias4.dtype).itemsize if has_bias else 0

    def vmem_est(bb, hb, ib, jb):
        e = 2 * bb * hb * ib * d * itemsize                       # q (double buffered)
        e += 2 * 2 * bb * hb * jb * d * itemsize                  # k, v
        e += 2 * bb * hb * ib * d * itemsize                      # out
        if has_bias:
            e += 2 * ((bb if bias_b_full else 1) * (hb if bias_h_full else 1)
                      * ib * jb * bias_itemsize)
        e += 2 * bb * jb * 4                                      # additive mask (worst case)
        e += bb * hb * ib * (8 + 4 * d)                           # m, l, f32 accumulator
        e += bb * hb * ib * d * mm_itemsize                       # pre-scaled q scratch
        e += 3 * bb * hb * ib * jb * 4                            # s / p f32 temporaries
        return e

    # Shrink tiles until the working set fits the VMEM budget (v7x: 64 MiB physical).
    while vmem_est(b_blk, h_blk, i_blk, j_blk) > vmem_budget_bytes:
        if b_blk > 1:
            b_blk = _largest_divisor_leq(b, b_blk - 1)
        elif j_blk >= 256 and (j_blk // 2) % 128 == 0:
            j_blk //= 2
        elif i_blk >= 2 * sub_q and (i_blk // 2) % sub_q == 0:
            i_blk //= 2
        elif h_blk > 1:
            h_blk = _largest_divisor_leq(h, h_blk - 1)
        else:
            break

    # Keep the parallel grid extent >= 2 so v7x's two TensorCores both get work.
    if (b // b_blk) * (h // h_blk) * ((i + i_blk - 1) // i_blk) < 2:
        if i_blk >= 2 * sub_q:
            i_blk = _round_up((i_blk + 1) // 2, sub_q)
        elif b_blk > 1:
            b_blk = 1

    # ---- pad i / j to the chosen tiles (masked instead of full-dim fallback) ---------
    i_pad = _round_up(i, i_blk)
    j_pad = _round_up(j, j_blk)
    if i_pad != i:
        q = jnp.pad(q, ((0, 0), (0, 0), (0, i_pad - i), (0, 0)))
    if j_pad != j:
        k = jnp.pad(k, ((0, 0), (0, 0), (0, j_pad - j), (0, 0)))
        v = jnp.pad(v, ((0, 0), (0, 0), (0, j_pad - j), (0, 0)))
    if has_bias and (i_pad != i or j_pad != j):
        bias4 = jnp.pad(bias4, ((0, 0), (0, 0), (0, i_pad - i), (0, j_pad - j)))

    has_mask = (mask is not None) or (j_pad != j)
    mask_b_full = False
    mask_add = None
    if has_mask:
        if mask is not None:
            madd = jnp.where(mask, 0.0, _MASK_VALUE).astype(jnp.float32)       # (b, j)
            if j_pad != j:
                madd = jnp.pad(madd, ((0, 0), (0, j_pad - j)),
                               constant_values=_MASK_VALUE)
            mask_add = madd.reshape(b, 1, 1, j_pad)
            mask_b_full = True
        else:  # only padding needs masking; broadcast over batch (no per-batch HBM stream)
            col = jnp.where(jnp.arange(j_pad) < j, 0.0, _MASK_VALUE).astype(jnp.float32)
            mask_add = col.reshape(1, 1, 1, j_pad)

    grid = (b // b_blk, h // h_blk, i_pad // i_blk, j_pad // j_blk)

    in_specs = [
        pl.BlockSpec((b_blk, h_blk, i_blk, d), lambda bi, hi, ii, ji: (bi, hi, ii, 0)),  # q
        pl.BlockSpec((b_blk, h_blk, j_blk, d), lambda bi, hi, ii, ji: (bi, hi, ji, 0)),  # k
        pl.BlockSpec((b_blk, h_blk, j_blk, d), lambda bi, hi, ii, ji: (bi, hi, ji, 0)),  # v
    ]
    inputs = [q, k, v]
    if has_bias:
        in_specs.append(pl.BlockSpec(
            (b_blk if bias_b_full else 1, h_blk if bias_h_full else 1, i_blk, j_blk),
            lambda bi, hi, ii, ji, _bb=bias_b_full, _bh=bias_h_full:
                (bi if _bb else 0, hi if _bh else 0, ii, ji)))
        inputs.append(bias4)
    if has_mask:
        in_specs.append(pl.BlockSpec(
            (b_blk if mask_b_full else 1, 1, 1, j_blk),
            lambda bi, hi, ii, ji, _mb=mask_b_full: (bi if _mb else 0, 0, 0, ji)))
        inputs.append(mask_add)

    kernel = functools.partial(
        _attend_kernel,
        scale=float(scale),
        has_bias=has_bias,
        has_mask=has_mask,
        softclamp=bool(enable_attn_softclamp),
        softclamp_value=float(attn_softclamp_value),
        mm_dtype=mm_dtype,
        exp_dtype=exp_dtype,
        exact_recip=(in_dtype == np.dtype(jnp.float32)),
    )

    # ---- cost estimate (advisory): K/V re-reads, bias bytes, tanh transcendentals ----
    i_tiles = i_pad // i_blk
    j_tiles = j_pad // j_blk
    bytes_accessed = 2 * int(q.size) * itemsize                           # q + out
    bytes_accessed += i_tiles * (int(k.size) + int(v.size)) * itemsize    # k/v per i tile
    if has_bias:
        bias_blk = ((b_blk if bias_b_full else 1) * (h_blk if bias_h_full else 1)
                    * i_blk * j_blk)
        bytes_accessed += grid[0] * grid[1] * i_tiles * j_tiles * bias_blk * bias_itemsize
    if has_mask:
        mask_blk = (b_blk if mask_b_full else 1) * j_blk
        bytes_accessed += grid[0] * grid[1] * i_tiles * j_tiles * mask_blk * 4
    cost = pl.CostEstimate(
        flops=int(4 * b * h * i_pad * j_pad * d),
        transcendentals=int(b * h * i_pad * j_pad * (2 if enable_attn_softclamp else 1)),
        bytes_accessed=int(bytes_accessed),
    )

    vmem_limit = int(min(max(vmem_est(b_blk, h_blk, i_blk, j_blk) + (8 << 20), 32 << 20),
                         64 << 20))

    out = pl.pallas_call(
        kernel,
        out_shape=jax.ShapeDtypeStruct((b, h, i_pad, d), in_dtype),
        grid_spec=pltpu.PrefetchScalarGridSpec(
            num_scalar_prefetch=0,
            grid=grid,
            in_specs=in_specs,
            out_specs=pl.BlockSpec((b_blk, h_blk, i_blk, d),
                                   lambda bi, hi, ii, ji: (bi, hi, ii, 0)),
            scratch_shapes=[
                pltpu.VMEM((b_blk, h_blk, i_blk, d), mm_dtype),      # pre-scaled q
                pltpu.VMEM((b_blk, h_blk, i_blk, 1), jnp.float32),   # running max m
                pltpu.VMEM((b_blk, h_blk, i_blk, 1), jnp.float32),   # running sum l
                pltpu.VMEM((b_blk, h_blk, i_blk, d), jnp.float32),   # f32 output accumulator
            ],
        ),
        compiler_params=pltpu.CompilerParams(
            dimension_semantics=("parallel", "parallel", "parallel", "arbitrary"),
            vmem_limit_bytes=vmem_limit),
        cost_estimate=cost,
    )(*inputs)

    if i_pad != i:
        out = out[:, :, :i, :]
    return out


def _reference_attend(q, k, v, mask, attn_bias, scale,
                      enable_attn_softclamp=False, attn_softclamp_value=50.0):
    sim = jnp.einsum('bhid,bhjd->bhij', q * scale, k)
    if attn_bias is not None:
        sim = sim + attn_bias
    if enable_attn_softclamp:
        sim = attn_softclamp_value * jnp.tanh(sim / attn_softclamp_value)
    if mask is not None:
        max_neg = -jnp.finfo(sim.dtype).max
        sim = jnp.where(mask[:, None, None, :], sim, max_neg)
    attn = jax.nn.softmax(sim, axis=-1)
    return jnp.einsum('bhij,bhjd->bhid', attn, v)


if __name__ == "__main__":
    key = jax.random.PRNGKey(0)
    kq, kk, kv, kb, km = jax.random.split(key, 5)

    b, h, n, d = 2, 4, 8, 32
    q = jax.random.normal(kq, (b, h, n, d), dtype=jnp.float32)
    k = jax.random.normal(kk, (b, h, n, d), dtype=jnp.float32)
    v = jax.random.normal(kv, (b, h, n, d), dtype=jnp.float32)
    attn_bias = jax.random.normal(kb, (b, h, n, n), dtype=jnp.float32)
    # mask a couple of trailing context positions for batch element 1
    mask = jnp.ones((b, n), dtype=bool).at[1, -2:].set(False)

    # 1) full-rank bias + mask
    out = jax.block_until_ready(attend(q, k, v, mask=mask, attn_bias=attn_bias))
    ref = _reference_attend(q, k, v, mask, attn_bias, d ** -0.5)
    assert out.shape == (b, h, n, d)
    assert jnp.allclose(out, ref, atol=2e-2, rtol=2e-2), "mismatch vs reference (bias+mask)"

    # 2) no bias, no mask (specialized kernel variant without those operands)
    out2 = jax.block_until_ready(attend(q, k, v))
    ref2 = _reference_attend(q, k, v, None, None, d ** -0.5)
    assert jnp.allclose(out2, ref2, atol=2e-2, rtol=2e-2), "mismatch vs reference (plain)"

    # 3) broadcastable 2-D bias + mask + softclamp enabled (exercises batch-blocking logic)
    bias_ij = jax.random.normal(km, (n, n), dtype=jnp.float32)
    out3 = jax.block_until_ready(
        attend(q, k, v, mask=mask, attn_bias=bias_ij, enable_attn_softclamp=True))
    ref3 = _reference_attend(q, k, v, mask, bias_ij, d ** -0.5,
                             enable_attn_softclamp=True)
    assert jnp.allclose(out3, ref3, atol=2e-2, rtol=2e-2), "mismatch vs reference (softclamp)"

    # 4) bf16 fast path: bf16 matmuls, bf16 exp (EUP bf16 path), approx reciprocal
    qb, kb_, vb = (t.astype(jnp.bfloat16) for t in (q, k, v))
    bias_b = attn_bias.astype(jnp.bfloat16)
    out4 = jax.block_until_ready(attend(qb, kb_, vb, mask=mask, attn_bias=bias_b))
    ref4 = _reference_attend(qb.astype(jnp.float32), kb_.astype(jnp.float32),
                             vb.astype(jnp.float32), mask,
                             bias_b.astype(jnp.float32), d ** -0.5)
    assert jnp.allclose(out4.astype(jnp.float32), ref4, atol=8e-2, rtol=8e-2), \
        "mismatch vs reference (bf16)"

    print("KERNEL_OK")
</pallas_src>

<mosaic_0001>
module attributes {stable_mosaic.version = 11 : i64} {
  func.func @_attend_kernel(%arg0: i32, %arg1: i32, %arg2: i32, %arg3: i32, %arg4: memref<1x4x8x32xf32, #tpu.memory_space<vmem>>, %arg5: memref<1x4x8x32xf32, #tpu.memory_space<vmem>>, %arg6: memref<1x4x8x32xf32, #tpu.memory_space<vmem>>, %arg7: memref<1x4x8x8xf32, #tpu.memory_space<vmem>>, %arg8: memref<1x1x1x8xf32, #tpu.memory_space<vmem>>, %arg9: memref<1x4x8x32xf32, #tpu.memory_space<vmem>>, %arg10: memref<1x4x8x32xf32, #tpu.memory_space<vmem>>, %arg11: memref<1x4x8x1xf32, #tpu.memory_space<vmem>>, %arg12: memref<1x4x8x1xf32, #tpu.memory_space<vmem>>, %arg13: memref<1x4x8x32xf32, #tpu.memory_space<vmem>>) attributes {dimension_semantics = [#tpu.dimension_semantics<parallel>, #tpu.dimension_semantics<parallel>, #tpu.dimension_semantics<parallel>, #tpu.dimension_semantics<arbitrary>], iteration_bounds = array<i64: 2, 1, 1, 1>, scalar_prefetch = 0 : i64, scratch_operands = 4 : i64, tpu.core_type = #tpu.core_type<tc>, window_params = [{transform_indices = @transform_0, window_bounds = array<i64: 1, 4, 8, 32>}, {transform_indices = @transform_1, window_bounds = array<i64: 1, 4, 8, 32>}, {transform_indices = @transform_2, window_bounds = array<i64: 1, 4, 8, 32>}, {transform_indices = @transform_3, window_bounds = array<i64: 1, 4, 8, 8>}, {transform_indices = @transform_4, window_bounds = array<i64: 1, 1, 1, 8>}, {transform_indices = @transform_5, window_bounds = array<i64: 1, 4, 8, 32>}]} {
    %c0_i32 = arith.constant 0 : i32
    %0 = arith.cmpi eq, %arg3, %c0_i32 : i32
    %1 = arith.extui %0 : i1 to i32
    %c0_i32_0 = arith.constant 0 : i32
    %2 = arith.cmpi ne, %1, %c0_i32_0 : i32
    scf.if %2 {
      %cst_49 = arith.constant 0xFF800000 : f32
      %43 = vector.broadcast %cst_49 : f32 to vector<1x4x8x1xf32>
      %c0_50 = arith.constant 0 : index
      %c0_51 = arith.constant 0 : index
      %c0_52 = arith.constant 0 : index
      %c0_53 = arith.constant 0 : index
      %44 = vector.load %arg11[%c0_50, %c0_51, %c0_52, %c0_53] : memref<1x4x8x1xf32, #tpu.memory_space<vmem>>, vector<1x4x8x1xf32>
      tpu.vector_store %arg11[%c0_50, %c0_51, %c0_52, %c0_53], %43 {strides = array<i32>} : memref<1x4x8x1xf32, #tpu.memory_space<vmem>>, vector<1x4x8x1xf32>,
      %cst_54 = arith.constant 0.000000e+00 : f32
      %45 = vector.broadcast %cst_54 : f32 to vector<1x4x8x1xf32>
      %c0_55 = arith.constant 0 : index
      %c0_56 = arith.constant 0 : index
      %c0_57 = arith.constant 0 : index
      %c0_58 = arith.constant 0 : index
      %46 = vector.load %arg12[%c0_55, %c0_56, %c0_57, %c0_58] : memref<1x4x8x1xf32, #tpu.memory_space<vmem>>, vector<1x4x8x1xf32>
      tpu.vector_store %arg12[%c0_55, %c0_56, %c0_57, %c0_58], %45 {strides = array<i32>} : memref<1x4x8x1xf32, #tpu.memory_space<vmem>>, vector<1x4x8x1xf32>,
      %cst_59 = arith.constant 0.000000e+00 : f32
      %47 = vector.broadcast %cst_59 : f32 to vector<1x4x8x32xf32>
      %c0_60 = arith.constant 0 : index
      %c0_61 = arith.constant 0 : index
      %c0_62 = arith.constant 0 : index
      %c0_63 = arith.constant 0 : index
      %48 = vector.load %arg13[%c0_60, %c0_61, %c0_62, %c0_63] : memref<1x4x8x32xf32, #tpu.memory_space<vmem>>, vector<1x4x8x32xf32>
      tpu.vector_store %arg13[%c0_60, %c0_61, %c0_62, %c0_63], %47 {strides = array<i32>} : memref<1x4x8x32xf32, #tpu.memory_space<vmem>>, vector<1x4x8x32xf32>,
      %c0_64 = arith.constant 0 : index
      %c0_65 = arith.constant 0 : index
      %c0_66 = arith.constant 0 : index
      %c0_67 = arith.constant 0 : index
      %49 = vector.load %arg4[%c0_64, %c0_65, %c0_66, %c0_67] : memref<1x4x8x32xf32, #tpu.memory_space<vmem>>, vector<1x4x8x32xf32>
      %cst_68 = arith.constant 0.176776692 : f32
      %50 = vector.broadcast %cst_68 : f32 to vector<1x4x8x32xf32>
      %51 = arith.mulf %49, %50 : vector<1x4x8x32xf32>
      %c0_69 = arith.constant 0 : index
      %c0_70 = arith.constant 0 : index
      %c0_71 = arith.constant 0 : index
      %c0_72 = arith.constant 0 : index
      %52 = vector.load %arg10[%c0_69, %c0_70, %c0_71, %c0_72] : memref<1x4x8x32xf32, #tpu.memory_space<vmem>>, vector<1x4x8x32xf32>
      tpu.vector_store %arg10[%c0_69, %c0_70, %c0_71, %c0_72], %51 {strides = array<i32>} : memref<1x4x8x32xf32, #tpu.memory_space<vmem>>, vector<1x4x8x32xf32>,
    } else {
    }
    %c0 = arith.constant 0 : index
    %c0_1 = arith.constant 0 : index
    %c0_2 = arith.constant 0 : index
    %c0_3 = arith.constant 0 : index
    %3 = vector.load %arg5[%c0, %c0_1, %c0_2, %c0_3] : memref<1x4x8x32xf32, #tpu.memory_space<vmem>>, vector<1x4x8x32xf32>
    %4 = vector.shape_cast %3 : vector<1x4x8x32xf32> to vector<4x8x32xf32>
    %c0_4 = arith.constant 0 : index
    %c0_5 = arith.constant 0 : index
    %c0_6 = arith.constant 0 : index
    %c0_7 = arith.constant 0 : index
    %5 = vector.load %arg10[%c0_4, %c0_5, %c0_6, %c0_7] : memref<1x4x8x32xf32, #tpu.memory_space<vmem>>, vector<1x4x8x32xf32>
    %6 = vector.shape_cast %5 : vector<1x4x8x32xf32> to vector<4x8x32xf32>
    "tpu.trace_start"() <{level = 10 : i32, message = "gid,gjd->gij"}> : () -> ()
    %cst = arith.constant dense<0.000000e+00> : vector<4x8x8xf32>
    %7 = tpu.matmul %6, %4, %cst {dimension_numbers = #tpu.dot_dimension_numbers<[2], [2], [1], [1], [0, 0, 0, 1, 1, 1], [0], [0]>} : vector<4x8x32xf32>, vector<4x8x32xf32>, vector<4x8x8xf32> -> vector<4x8x8xf32>
    "tpu.trace_stop"() : () -> ()
    %8 = vector.shape_cast %7 : vector<4x8x8xf32> to vector<1x4x8x8xf32>
    %c0_8 = arith.constant 0 : index
    %c0_9 = arith.constant 0 : index
    %c0_10 = arith.constant 0 : index
    %c0_11 = arith.constant 0 : index
    %9 = vector.load %arg7[%c0_8, %c0_9, %c0_10, %c0_11] : memref<1x4x8x8xf32, #tpu.memory_space<vmem>>, vector<1x4x8x8xf32>
    %10 = arith.addf %8, %9 : vector<1x4x8x8xf32>
    %c0_12 = arith.constant 0 : index
    %c0_13 = arith.constant 0 : index
    %c0_14 = arith.constant 0 : index
    %c0_15 = arith.constant 0 : index
    %11 = vector.load %arg8[%c0_12, %c0_13, %c0_14, %c0_15] : memref<1x1x1x8xf32, #tpu.memory_space<vmem>>, vector<1x1x1x8xf32>
    %12 = vector.broadcast %11 : vector<1x1x1x8xf32> to vector<1x4x8x8xf32>
    %13 = arith.addf %10, %12 : vector<1x4x8x8xf32>
    %c0_16 = arith.constant 0 : index
    %c0_17 = arith.constant 0 : index
    %c0_18 = arith.constant 0 : index
    %c0_19 = arith.constant 0 : index
    %14 = vector.load %arg11[%c0_16, %c0_17, %c0_18, %c0_19] : memref<1x4x8x1xf32, #tpu.memory_space<vmem>>, vector<1x4x8x1xf32>
    %cst_20 = arith.constant dense<0xFF800000> : vector<1x4x8xf32>
    %15 = vector.multi_reduction <maximumf>, %13, %cst_20 [3] : vector<1x4x8x8xf32> to vector<1x4x8xf32>
    %16 = vector.shape_cast %15 : vector<1x4x8xf32> to vector<1x4x8x1xf32>
    %17 = arith.maximumf %14, %16 : vector<1x4x8x1xf32>
    %18 = arith.subf %14, %17 : vector<1x4x8x1xf32>
    %19 = math.exp %18 : vector<1x4x8x1xf32>
    %20 = vector.broadcast %17 : vector<1x4x8x1xf32> to vector<1x4x8x8xf32>
    %21 = arith.subf %13, %20 : vector<1x4x8x8xf32>
    %22 = math.exp %21 : vector<1x4x8x8xf32>
    %c0_21 = arith.constant 0 : index
    %c0_22 = arith.constant 0 : index
    %c0_23 = arith.constant 0 : index
    %c0_24 = arith.constant 0 : index
    %23 = vector.load %arg12[%c0_21, %c0_22, %c0_23, %c0_24] : memref<1x4x8x1xf32, #tpu.memory_space<vmem>>, vector<1x4x8x1xf32>
    %24 = arith.mulf %19, %23 : vector<1x4x8x1xf32>
    %cst_25 = arith.constant dense<0.000000e+00> : vector<1x4x8xf32>
    %25 = vector.multi_reduction <add>, %22, %cst_25 [3] : vector<1x4x8x8xf32> to vector<1x4x8xf32>
    %26 = vector.shape_cast %25 : vector<1x4x8xf32> to vector<1x4x8x1xf32>
    %27 = arith.addf %24, %26 : vector<1x4x8x1xf32>
    %c0_26 = arith.constant 0 : index
    %c0_27 = arith.constant 0 : index
    %c0_28 = arith.constant 0 : index
    %c0_29 = arith.constant 0 : index
    %28 = vector.load %arg12[%c0_26, %c0_27, %c0_28, %c0_29] : memref<1x4x8x1xf32, #tpu.memory_space<vmem>>, vector<1x4x8x1xf32>
    tpu.vector_store %arg12[%c0_26, %c0_27, %c0_28, %c0_29], %27 {strides = array<i32>} : memref<1x4x8x1xf32, #tpu.memory_space<vmem>>, vector<1x4x8x1xf32>,
    %29 = vector.shape_cast %22 : vector<1x4x8x8xf32> to vector<4x8x8xf32>
    %c0_30 = arith.constant 0 : index
    %c0_31 = arith.constant 0 : index
    %c0_32 = arith.constant 0 : index
    %c0_33 = arith.constant 0 : index
    %30 = vector.load %arg6[%c0_30, %c0_31, %c0_32, %c0_33] : memref<1x4x8x32xf32, #tpu.memory_space<vmem>>, vector<1x4x8x32xf32>
    %31 = vector.shape_cast %30 : vector<1x4x8x32xf32> to vector<4x8x32xf32>
    "tpu.trace_start"() <{level = 10 : i32, message = "gij,gjd->gid"}> : () -> ()
    %cst_34 = arith.constant dense<0.000000e+00> : vector<4x8x32xf32>
    %32 = tpu.matmul %29, %31, %cst_34 {dimension_numbers = #tpu.dot_dimension_numbers<[2], [1], [1], [2], [0, 0, 0, 1, 1, 2], [0], [0]>} : vector<4x8x8xf32>, vector<4x8x32xf32>, vector<4x8x32xf32> -> vector<4x8x32xf32>
    "tpu.trace_stop"() : () -> ()
    %33 = vector.shape_cast %32 : vector<4x8x32xf32> to vector<1x4x8x32xf32>
    %c0_35 = arith.constant 0 : index
    %c0_36 = arith.constant 0 : index
    %c0_37 = arith.constant 0 : index
    %c0_38 = arith.constant 0 : index
    %34 = vector.load %arg13[%c0_35, %c0_36, %c0_37, %c0_38] : memref<1x4x8x32xf32, #tpu.memory_space<vmem>>, vector<1x4x8x32xf32>
    %35 = vector.broadcast %19 : vector<1x4x8x1xf32> to vector<1x4x8x32xf32>
    %36 = arith.mulf %35, %34 : vector<1x4x8x32xf32>
    %37 = arith.addf %36, %33 : vector<1x4x8x32xf32>
    %c0_39 = arith.constant 0 : index
    %c0_40 = arith.constant 0 : index
    %c0_41 = arith.constant 0 : index
    %c0_42 = arith.constant 0 : index
    %38 = vector.load %arg13[%c0_39, %c0_40, %c0_41, %c0_42] : memref<1x4x8x32xf32, #tpu.memory_space<vmem>>, vector<1x4x8x32xf32>
    tpu.vector_store %arg13[%c0_39, %c0_40, %c0_41, %c0_42], %37 {strides = array<i32>} : memref<1x4x8x32xf32, #tpu.memory_space<vmem>>, vector<1x4x8x32xf32>,
    %c0_43 = arith.constant 0 : index
    %c0_44 = arith.constant 0 : index
    %c0_45 = arith.constant 0 : index
    %c0_46 = arith.constant 0 : index
    %39 = vector.load %arg11[%c0_43, %c0_44, %c0_45, %c0_46] : memref<1x4x8x1xf32, #tpu.memory_space<vmem>>, vector<1x4x8x1xf32>
    tpu.vector_store %arg11[%c0_43, %c0_44, %c0_45, %c0_46], %17 {strides = array<i32>} : memref<1x4x8x1xf32, #tpu.memory_space<vmem>>, vector<1x4x8x1xf32>,
    %c0_i32_47 = arith.constant 0 : i32
    %40 = arith.cmpi eq, %arg3, %c0_i32_47 : i32
    %41 = arith.extui %40 : i1 to i32
    %c0_i32_48 = arith.constant 0 : i32
    %42 = arith.cmpi ne, %41, %c0_i32_48 : i32
    scf.if %42 {
      %c0_49 = arith.constant 0 : index
      %c0_50 = arith.constant 0 : index
      %c0_51 = arith.constant 0 : index
      %c0_52 = arith.constant 0 : index
      %43 = vector.load %arg12[%c0_49, %c0_50, %c0_51, %c0_52] : memref<1x4x8x1xf32, #tpu.memory_space<vmem>>, vector<1x4x8x1xf32>
      %cst_53 = arith.constant 1.000000e+00 : f32
      %44 = vector.broadcast %cst_53 : f32 to vector<1x4x8x1xf32>
      %45 = arith.divf %44, %43 : vector<1x4x8x1xf32>
      %c0_54 = arith.constant 0 : index
      %c0_55 = arith.constant 0 : index
      %c0_56 = arith.constant 0 : index
      %c0_57 = arith.constant 0 : index
      %46 = vector.load %arg13[%c0_54, %c0_55, %c0_56, %c0_57] : memref<1x4x8x32xf32, #tpu.memory_space<vmem>>, vector<1x4x8x32xf32>
      %47 = vector.broadcast %45 : vector<1x4x8x1xf32> to vector<1x4x8x32xf32>
      %48 = arith.mulf %46, %47 : vector<1x4x8x32xf32>
      %c0_58 = arith.constant 0 : index
      %c0_59 = arith.constant 0 : index
      %c0_60 = arith.constant 0 : index
      %c0_61 = arith.constant 0 : index
      %49 = vector.load %arg9[%c0_58, %c0_59, %c0_60, %c0_61] : memref<1x4x8x32xf32, #tpu.memory_space<vmem>>, vector<1x4x8x32xf32>
      tpu.vector_store %arg9[%c0_58, %c0_59, %c0_60, %c0_61], %48 {strides = array<i32>} : memref<1x4x8x32xf32, #tpu.memory_space<vmem>>, vector<1x4x8x32xf32>,
    } else {
    }
    return
  }
  func.func @transform_0(%arg0: i32, %arg1: i32, %arg2: i32, %arg3: i32) -> (i32, i32, i32, i32) {
    %c0_i32 = arith.constant 0 : i32
    %c0_i32_0 = arith.constant 0 : i32
    return %arg0, %arg1, %arg2, %c0_i32 : i32, i32, i32, i32
  }
  func.func @transform_1(%arg0: i32, %arg1: i32, %arg2: i32, %arg3: i32) -> (i32, i32, i32, i32) {
    %c0_i32 = arith.constant 0 : i32
    %c0_i32_0 = arith.constant 0 : i32
    return %arg0, %arg1, %arg3, %c0_i32 : i32, i32, i32, i32
  }
  func.func @transform_2(%arg0: i32, %arg1: i32, %arg2: i32, %arg3: i32) -> (i32, i32, i32, i32) {
    %c0_i32 = arith.constant 0 : i32
    %c0_i32_0 = arith.constant 0 : i32
    return %arg0, %arg1, %arg3, %c0_i32 : i32, i32, i32, i32
  }
  func.func @transform_3(%arg0: i32, %arg1: i32, %arg2: i32, %arg3: i32) -> (i32, i32, i32, i32) {
    %c0_i32 = arith.constant 0 : i32
    return %arg0, %arg1, %arg2, %arg3 : i32, i32, i32, i32
  }
  func.func @transform_4(%arg0: i32, %arg1: i32, %arg2: i32, %arg3: i32) -> (i32, i32, i32, i32) {
    %c0_i32 = arith.constant 0 : i32
    %c0_i32_0 = arith.constant 0 : i32
    %c0_i32_1 = arith.constant 0 : i32
    return %arg0, %c0_i32, %c0_i32_0, %arg3 : i32, i32, i32, i32
  }
  func.func @transform_5(%arg0: i32, %arg1: i32, %arg2: i32, %arg3: i32) -> (i32, i32, i32, i32) {
    %c0_i32 = arith.constant 0 : i32
    %c0_i32_0 = arith.constant 0 : i32
    return %arg0, %arg1, %arg2, %c0_i32 : i32, i32, i32, i32
  }
}

</mosaic_0001>

<llo_original>
// kernel: tpu_custom_call.1
$region0: #{tpu_custom_call.1}
  #allocation0 [shape = 'u32[]', space=smem, size = 0x4, offset = 0x4, fixed_abs, tag = 'smem constant byte address 0x4 - core index']
  #allocation1 [shape = 'u32[144,128]{1,0:T(1,128)}', space=vmem, size = 0x12000, scoped, tag = 'internal scratch']
  #allocation2 [shape = 'f32[1,4,8,32]{3,2,1,0:T(8,128)}', space=vmem, size = 0x4000, scoped, tag = 'scratch operand']
  #allocation3 [shape = 'f32[1,4,8,1]{3,2,1,0:T(8,128)}', space=vmem, size = 0x4000, scoped, tag = 'scratch operand']
  #allocation4 [shape = 'f32[1,4,8,1]{3,2,1,0:T(8,128)}', space=vmem, size = 0x4000, scoped, tag = 'scratch operand']
  #allocation5 [shape = 'f32[1,4,8,32]{3,2,1,0:T(8,128)}', space=vmem, size = 0x4000, scoped, tag = 'scratch operand']
  %s0 = inlined_call_operand.hbm [shape: f32[2,4,8,32], index: 0, kind: input, shape index: {}]
  %s1 = inlined_call_operand.hbm [shape: f32[2,4,8,32], index: 1, kind: input, shape index: {}]
  %s2 = inlined_call_operand.hbm [shape: f32[2,4,8,32], index: 2, kind: input, shape index: {}]
  %s3 = inlined_call_operand.hbm [shape: f32[2,4,8,8], index: 3, kind: input, shape index: {}]
  %s4 = inlined_call_operand.vmem [shape: f32[2,1,1,8], index: 4, kind: input, shape index: {}]
  %s5 = inlined_call_operand.hbm [shape: f32[2,4,8,32], index: 5, kind: output, shape index: {}]
  %s6 = sld [smem:[#allocation0]]
  $region77: #{tpu_custom_call.1} parent=0
    _
  %s8 = ssub.s32 1, %s6
  %s9 = scalar_select 0, %s8, %s6
  $region1: #{tpu_custom_call.1} parent=0
    #allocation6 [shape = 'u8[32768]{0}', space=vmem, size = 0x8000, scoped, tag = 'input window, operand 0']
    #allocation7 [shape = 's32[2]{0}', space=sflag, size = 0x8, scoped, tag = 'scoped memory for tpu_custom_call.1']
    #allocation8 [shape = 's32[2]{0}', space=sflag, size = 0x8, scoped, tag = 'scoped memory for tpu_custom_call.1']
    #allocation9 [shape = 'u8[32768]{0}', space=vmem, size = 0x8000, scoped, tag = 'input window, operand 1']
    #allocation10 [shape = 's32[2]{0}', space=sflag, size = 0x8, scoped, tag = 'scoped memory for tpu_custom_call.1']
    #allocation11 [shape = 'u8[32768]{0}', space=vmem, size = 0x8000, scoped, tag = 'input window, operand 2']
    #allocation12 [shape = 'u8[32768]{0}', space=vmem, size = 0x8000, scoped, tag = 'input window, operand 3']
    #allocation13 [shape = 's32[2]{0}', space=sflag, size = 0x8, scoped, tag = 'scoped memory for tpu_custom_call.1']
    #allocation14 [shape = 'u8[32768]{0}', space=vmem, size = 0x8000, scoped, tag = 'output window, operand 0']
    %10 = vsyncpa [#allocation7], 0
    %s11 = scalar_lea.sflag [#allocation7], 1
    %12 = vsyncpa %s11, 0
    %13 = vsyncpa [#allocation10], 0
    %s14 = scalar_lea.sflag [#allocation10], 1
    %15 = vsyncpa %s14, 0
    %16 = vsyncpa [#allocation13], 0
    %s17 = scalar_lea.sflag [#allocation13], 1
    %18 = vsyncpa %s17, 0
    %19 = vsyncpa [#allocation8], 0
    %s20 = scalar_lea.sflag [#allocation8], 1
    %21 = vsyncpa %s20, 0
    loop: start=0, step=1, limit=4
    $region2: #{tpu_custom_call.1} parent=1 // loop_pre_header
      _
    $region3: #{tpu_custom_call.1} parent=1 // loop_header
      %s23 = sphi 0, %s27
      %p24 = scmp.ge.s32.totalorder %s23, 4
      %s30 = sphi 0, %s56
      %s31 = sphi 0, %s52
      %s32 = sphi 0, %s48
      %s33 = sphi 0, %s44
      %s34 = sphi 0, %s30
      %s35 = sphi 0, %s31
      %s36 = sphi 0, %s32
      %s37 = sphi 0, %s33
      %s38 = sphi 0, %s34
      %s39 = sphi 0, %s35
      %s40 = sphi 0, %s36
      %s41 = sphi 0, %s37
      %s63 = sphi 0, %s65
      %s66 = sphi 0, %s63
      %s67 = sphi 0, %s66
      %s83 = sphi 0, %s67
      %s93 = sphi 0, %s95
      %s96 = sphi 0, %s93
      %s97 = sphi 0, %s96
      %s113 = sphi 0, %s97
      %s123 = sphi 0, %s125
      %s126 = sphi 0, %s123
      %s127 = sphi 0, %s126
      %s143 = sphi 0, %s127
      %s155 = sphi 0, %s157
      %s158 = sphi 0, %s155
      %s159 = sphi 0, %s158
      %s175 = sphi 0, %s159
      %s183 = sphi 0, %s185
      %s186 = sphi 0, %s183
      %s187 = sphi 0, %s186
      %s203 = sphi 0, %s187
      %s213 = sphi 0, %s215
      %s216 = sphi 0, %s213
      %s217 = sphi 0, %s216
      %s233 = sphi 0, %s217
    $region4: #{tpu_custom_call.1} parent=1 // loop_header_branch
      %26 = sbr.rel (%p24) target = $region8
    $region5: #{tpu_custom_call.1} parent=1 // loop_body
      %s28 = ssub.s32 %s23, 1
      %s29 = ssub.s32 %s23, 2
      %s42 = sadd.s32 1, %s33
      %p43 = scmp.ge.s32.totalorder %s42, 1
      %s44 = scalar_select %p43, 0, %s42
      %s45 = sadd.s32 1, %s32
      %s46 = scalar_select %p43, %s45, %s32
      %p47 = scmp.ge.s32.totalorder %s46, 1
      %s48 = scalar_select %p47, 0, %s46
      %s49 = sadd.s32 1, %s31
      %s50 = scalar_select %p47, %s49, %s31
      %p51 = scmp.ge.s32.totalorder %s50, 1
      %s52 = scalar_select %p51, 0, %s50
      %s53 = sadd.s32 1, %s30
      %s54 = scalar_select %p51, %s53, %s30
      %p55 = scmp.ge.s32.totalorder %s54, 2
      %s56 = scalar_select %p55, 0, %s54
      %s57 = ssub.s32 %s30, %s56
      %s58 = ssub.s32 %s31, %s52
      %s59 = sor.u32 %s57, %s58
      %s60 = ssub.s32 %s32, %s48
      %s61 = sor.u32 %s59, %s60
      %p62 = scmp.eq.s32.totalorder %s61, 0
      %s64 = sadd.s32 %s63, 1
      %s65 = scalar_select %p62, %s63, %s64
      %p68 = pneg %p62
      %p69 = scmp.eq.s32.totalorder %s23, 1
      %p70 = por %p68, %p69
      %p71 = scmp.ne.s32.totalorder %s63, %s66
      %p72 = scmp.eq.s32.totalorder %s23, 0
      %p73 = por %p71, %p72
      %p74 = scmp.ne.s32.totalorder %s63, %s66
      %p75 = scmp.eq.s32.totalorder %s28, 1
      %p76 = por %p74, %p75
      %p77 = scmp.ne.s32.totalorder %s66, %s67
      %p78 = scmp.eq.s32.totalorder %s28, 0
      %p79 = por %p77, %p78
      %p80 = scmp.ne.s32.totalorder %s66, %s67
      %p81 = scmp.eq.s32.totalorder %s29, 1
      %p82 = por %p80, %p81
      %p84 = scmp.ne.s32.totalorder %s67, %s83
      %p85 = scmp.eq.s32.totalorder %s29, 0
      %p86 = por %p84, %p85
      %s87 = ssub.s32 %s30, %s56
      %s88 = ssub.s32 %s31, %s52
      %s89 = sor.u32 %s87, %s88
      %s90 = ssub.s32 %s33, %s44
      %s91 = sor.u32 %s89, %s90
      %p92 = scmp.eq.s32.totalorder %s91, 0
      %s94 = sadd.s32 %s93, 1
      %s95 = scalar_select %p92, %s93, %s94
      %p98 = pneg %p92
      %p99 = scmp.eq.s32.totalorder %s23, 1
      %p100 = por %p98, %p99
      %p101 = scmp.ne.s32.totalorder %s93, %s96
      %p102 = scmp.eq.s32.totalorder %s23, 0
      %p103 = por %p101, %p102
      %p104 = scmp.ne.s32.totalorder %s93, %s96
      %p105 = scmp.eq.s32.totalorder %s28, 1
      %p106 = por %p104, %p105
      %p107 = scmp.ne.s32.totalorder %s96, %s97
      %p108 = scmp.eq.s32.totalorder %s28, 0
      %p109 = por %p107, %p108
      %p110 = scmp.ne.s32.totalorder %s96, %s97
      %p111 = scmp.eq.s32.totalorder %s29, 1
      %p112 = por %p110, %p111
      %p114 = scmp.ne.s32.totalorder %s97, %s113
      %p115 = scmp.eq.s32.totalorder %s29, 0
      %p116 = por %p114, %p115
      %s117 = ssub.s32 %s30, %s56
      %s118 = ssub.s32 %s31, %s52
      %s119 = sor.u32 %s117, %s118
      %s120 = ssub.s32 %s33, %s44
      %s121 = sor.u32 %s119, %s120
      %p122 = scmp.eq.s32.totalorder %s121, 0
      %s124 = sadd.s32 %s123, 1
      %s125 = scalar_select %p122, %s123, %s124
      %p128 = pneg %p122
      %p129 = scmp.eq.s32.totalorder %s23, 1
      %p130 = por %p128, %p129
      %p131 = scmp.ne.s32.totalorder %s123, %s126
      %p132 = scmp.eq.s32.totalorder %s23, 0
      %p133 = por %p131, %p132
      %p134 = scmp.ne.s32.totalorder %s123, %s126
      %p135 = scmp.eq.s32.totalorder %s28, 1
      %p136 = por %p134, %p135
      %p137 = scmp.ne.s32.totalorder %s126, %s127
      %p138 = scmp.eq.s32.totalorder %s28, 0
      %p139 = por %p137, %p138
      %p140 = scmp.ne.s32.totalorder %s126, %s127
      %p141 = scmp.eq.s32.totalorder %s29, 1
      %p142 = por %p140, %p141
      %p144 = scmp.ne.s32.totalorder %s127, %s143
      %p145 = scmp.eq.s32.totalorder %s29, 0
      %p146 = por %p144, %p145
      %s147 = ssub.s32 %s30, %s56
      %s148 = ssub.s32 %s31, %s52
      %s149 = sor.u32 %s147, %s148
      %s150 = ssub.s32 %s32, %s48
      %s151 = sor.u32 %s149, %s150
      %s152 = ssub.s32 %s33, %s44
      %s153 = sor.u32 %s151, %s152
      %p154 = scmp.eq.s32.totalorder %s153, 0
      %s156 = sadd.s32 %s155, 1
      %s157 = scalar_select %p154, %s155, %s156
      %p160 = pneg %p154
      %p161 = scmp.eq.s32.totalorder %s23, 1
      %p162 = por %p160, %p161
      %p163 = scmp.ne.s32.totalorder %s155, %s158
      %p164 = scmp.eq.s32.totalorder %s23, 0
      %p165 = por %p163, %p164
      %p166 = scmp.ne.s32.totalorder %s155, %s158
      %p167 = scmp.eq.s32.totalorder %s28, 1
      %p168 = por %p166, %p167
      %p169 = scmp.ne.s32.totalorder %s158, %s159
      %p170 = scmp.eq.s32.totalorder %s28, 0
      %p171 = por %p169, %p170
      %p172 = scmp.ne.s32.totalorder %s158, %s159
      %p173 = scmp.eq.s32.totalorder %s29, 1
      %p174 = por %p172, %p173
      %p176 = scmp.ne.s32.totalorder %s159, %s175
      %p177 = scmp.eq.s32.totalorder %s29, 0
      %p178 = por %p176, %p177
      %s179 = ssub.s32 %s30, %s56
      %s180 = ssub.s32 %s33, %s44
      %s181 = sor.u32 %s179, %s180
      %p182 = scmp.eq.s32.totalorder %s181, 0
      %s184 = sadd.s32 %s183, 1
      %s185 = scalar_select %p182, %s183, %s184
      %p188 = pneg %p182
      %p189 = scmp.eq.s32.totalorder %s23, 1
      %p190 = por %p188, %p189
      %p191 = scmp.ne.s32.totalorder %s183, %s186
      %p192 = scmp.eq.s32.totalorder %s23, 0
      %p193 = por %p191, %p192
      %p194 = scmp.ne.s32.totalorder %s183, %s186
      %p195 = scmp.eq.s32.totalorder %s28, 1
      %p196 = por %p194, %p195
      %p197 = scmp.ne.s32.totalorder %s186, %s187
      %p198 = scmp.eq.s32.totalorder %s28, 0
      %p199 = por %p197, %p198
      %p200 = scmp.ne.s32.totalorder %s186, %s187
      %p201 = scmp.eq.s32.totalorder %s29, 1
      %p202 = por %p200, %p201
      %p204 = scmp.ne.s32.totalorder %s187, %s203
      %p205 = scmp.eq.s32.totalorder %s29, 0
      %p206 = por %p204, %p205
      %s207 = ssub.s32 %s30, %s56
      %s208 = ssub.s32 %s31, %s52
      %s209 = sor.u32 %s207, %s208
      %s210 = ssub.s32 %s32, %s48
      %s211 = sor.u32 %s209, %s210
      %p212 = scmp.eq.s32.totalorder %s211, 0
      %s214 = sadd.s32 %s213, 1
      %s215 = scalar_select %p212, %s213, %s214
      %p218 = pneg %p212
      %p219 = scmp.eq.s32.totalorder %s23, 1
      %p220 = por %p218, %p219
      %p221 = scmp.ne.s32.totalorder %s213, %s216
      %p222 = scmp.eq.s32.totalorder %s23, 0
      %p223 = por %p221, %p222
      %p224 = scmp.ne.s32.totalorder %s213, %s216
      %p225 = scmp.eq.s32.totalorder %s28, 1
      %p226 = por %p224, %p225
      %p227 = scmp.ne.s32.totalorder %s216, %s217
      %p228 = scmp.eq.s32.totalorder %s28, 0
      %p229 = por %p227, %p228
      %p230 = scmp.ne.s32.totalorder %s216, %s217
      %p231 = scmp.eq.s32.totalorder %s29, 1
      %p232 = por %p230, %p231
      %p234 = scmp.ne.s32.totalorder %s217, %s233
      %p235 = scmp.eq.s32.totalorder %s29, 0
      %p236 = por %p234, %p235
      %p237 = scmp.le.s32.totalorder 1, %s23
      %p238 = scmp.lt.s32.totalorder %s23, 3
      %p239 = pnand %p237, %p238
      %p240 = pneg %p239
      // Predicated region
      $region9: #{tpu_custom_call.1} parent=5 // pred_check
        _
      $region10: #{tpu_custom_call.1} parent=5 // pred_check_branch
        %242 = sbr.rel (%p239) target = $region12
      $region11: #{tpu_custom_call.1} parent=5 // pred_region
        %s243 = ssub.s32 %s23, 1
      $region12: #{tpu_custom_call.1} parent=5 // pred_fallthru
        _
      %p244 = scmp.lt.s32.totalorder %s23, 2
      // Predicated region
      $region13: #{tpu_custom_call.1} parent=5 // pred_check
        %p245 = pneg %p244
      $region14: #{tpu_custom_call.1} parent=5 // pred_check_branch
        %247 = sbr.rel (%p245) target = $region16
      $region15: #{tpu_custom_call.1} parent=5 // pred_region
        // Predicated region
        $region17: #{tpu_custom_call.1} parent=15 // pred_check
          %p248 = pneg %p73
        $region18: #{tpu_custom_call.1} parent=15 // pred_check_branch
          %250 = sbr.rel (%p248) target = $region20
        $region19: #{tpu_custom_call.1} parent=15 // pred_region
          %s251 = sand.u32 %s63, 1
          %s252 = scalar_lea.sflag [#allocation7], %s251
          %s253 = sand.u32 %s63, 1
          %s254 = smul.addr %s253, 32
          %s255 = scalar_lea.vmem [#allocation6], %s254
          %s256 = smul.u32 4, %s31
          %s258 = ssub.s32 512, 512
          %259 = vsyncadd %s252, %s258
          %s260 = sadd.s32 %s32, %s256
          %s261 = smul.addr %s30, 4
          %s262 = sadd.s32 %s260, %s261
          %s263 = smul.addr %s262, 128
          %s264 = scalar_lea.hbm %s0, %s263
          %s265 = sshll.u32 %s255, 4
          %s266 = int_to_ptr.vmem [resolvable:$true] %s265
          %271 = dma.hbm_to_vmem [thread:$0]  %s264, 512, %s266, %s252, 128, 128, 8
        $region20: #{tpu_custom_call.1} parent=15 // pred_fallthru
          _
        // Predicated region
        $region21: #{tpu_custom_call.1} parent=15 // pred_check
          %p272 = pneg %p103
        $region22: #{tpu_custom_call.1} parent=15 // pred_check_branch
          %274 = sbr.rel (%p272) target = $region24
        $region23: #{tpu_custom_call.1} parent=15 // pred_region
          %s275 = sand.u32 %s23, 1
          %s276 = scalar_lea.sflag [#allocation10], %s275
          %s277 = sand.u32 %s93, 1
          %s278 = smul.addr %s277, 32
          %s279 = scalar_lea.vmem [#allocation9], %s278
          %s280 = smul.u32 4, %s31
          %s282 = ssub.s32 512, 512
          %283 = vsyncadd %s276, %s282
          %s284 = sadd.s32 %s33, %s280
          %s285 = smul.addr %s30, 4
          %s286 = sadd.s32 %s284, %s285
          %s287 = smul.addr %s286, 128
          %s288 = scalar_lea.hbm %s1, %s287
          %s289 = sshll.u32 %s279, 4
          %s290 = int_to_ptr.vmem [resolvable:$true] %s289
          %295 = dma.hbm_to_vmem [thread:$0]  %s288, 512, %s290, %s276, 128, 128, 8
        $region24: #{tpu_custom_call.1} parent=15 // pred_fallthru
          _
        // Predicated region
        $region25: #{tpu_custom_call.1} parent=15 // pred_check
          %p296 = pneg %p133
        $region26: #{tpu_custom_call.1} parent=15 // pred_check_branch
          %298 = sbr.rel (%p296) target = $region28
        $region27: #{tpu_custom_call.1} parent=15 // pred_region
          %s299 = sand.u32 %s23, 1
          %s300 = scalar_lea.sflag [#allocation10], %s299
          %s301 = sand.u32 %s123, 1
          %s302 = smul.addr %s301, 32
          %s303 = scalar_lea.vmem [#allocation11], %s302
          %s304 = smul.u32 4, %s31
          %s306 = ssub.s32 512, 512
          %307 = vsyncadd %s300, %s306
          %s308 = sadd.s32 %s33, %s304
          %s309 = smul.addr %s30, 4
          %s310 = sadd.s32 %s308, %s309
          %s311 = smul.addr %s310, 128
          %s312 = scalar_lea.hbm %s2, %s311
          %s313 = sshll.u32 %s303, 4
          %s314 = int_to_ptr.vmem [resolvable:$true] %s313
          %319 = dma.hbm_to_vmem [thread:$0]  %s312, 512, %s314, %s300, 128, 128, 8
        $region28: #{tpu_custom_call.1} parent=15 // pred_fallthru
          _
        // Predicated region
        $region29: #{tpu_custom_call.1} parent=15 // pred_check
          %p320 = pneg %p165
        $region30: #{tpu_custom_call.1} parent=15 // pred_check_branch
          %322 = sbr.rel (%p320) target = $region32
        $region31: #{tpu_custom_call.1} parent=15 // pred_region
          %s323 = sand.u32 %s155, 1
          %s324 = scalar_lea.sflag [#allocation13], %s323
          %s325 = sand.u32 %s155, 1
          %s326 = smul.addr %s325, 32
          %s327 = scalar_lea.vmem [#allocation12], %s326
          %s328 = smul.u32 4, %s31
          %s330 = ssub.s32 512, 512
          %331 = vsyncadd %s324, %s330
          %s332 = sadd.s32 %s33, %s32
          %s333 = sadd.s32 %s332, %s328
          %s334 = smul.addr %s30, 4
          %s335 = sadd.s32 %s333, %s334
          %s336 = smul.addr %s335, 128
          %s337 = scalar_lea.hbm %s3, %s336
          %s338 = sshll.u32 %s327, 4
          %s339 = int_to_ptr.vmem [resolvable:$true] %s338
          %344 = dma.hbm_to_vmem [thread:$0]  %s337, 512, %s339, %s324, 128, 128, 8
        $region32: #{tpu_custom_call.1} parent=15 // pred_fallthru
          _
        // Predicated region
        $region33: #{tpu_custom_call.1} parent=15 // pred_check
          %p345 = pneg %p193
        $region34: #{tpu_custom_call.1} parent=15 // pred_check_branch
          %347 = sbr.rel (%p345) target = $region36
        $region35: #{tpu_custom_call.1} parent=15 // pred_region
          %p348 = scmp.lt.s32.totalorder %s30, 1
          %s349 = scalar_select %p348, %s30, 1
          %p350 = scmp.lt.s32.totalorder %s33, 0
          %s351 = scalar_select %p350, %s33, 0
          %s352 = sadd.s32 %s351, %s349
          %s353 = scalar_lea.vmem %s4, %s352
        $region36: #{tpu_custom_call.1} parent=15 // pred_fallthru
          _
      $region16: #{tpu_custom_call.1} parent=5 // pred_fallthru
        _
      %p354 = scmp.le.s32.totalorder 1, %s23
      %p355 = scmp.lt.s32.totalorder %s23, 3
      %p356 = pnand %p354, %p355
      %p357 = pneg %p356
      // Predicated region
      $region37: #{tpu_custom_call.1} parent=5 // pred_check
        _
      $region38: #{tpu_custom_call.1} parent=5 // pred_check_branch
        %359 = sbr.rel (%p356) target = $region40
      $region39: #{tpu_custom_call.1} parent=5 // pred_region
        %s360 = ssub.s32 %s23, 1
        %s361 = sand.u32 %s66, 1
        %s362 = scalar_lea.sflag [#allocation7], %s361
        %s363 = sand.u32 %s66, 1
        %s364 = smul.addr %s363, 32
        %s365 = scalar_lea.vmem [#allocation6], %s364
        // Predicated region
        $region41: #{tpu_custom_call.1} parent=39 // pred_check
          %p366 = pneg %p79
        $region42: #{tpu_custom_call.1} parent=39 // pred_check_branch
          %368 = sbr.rel (%p366) target = $region44
        $region43: #{tpu_custom_call.1} parent=39 // pred_region
          %369 = dma.done %s362, 512
        $region44: #{tpu_custom_call.1} parent=39 // pred_fallthru
          _
        %s370 = sand.u32 %s28, 1
        %s371 = scalar_lea.sflag [#allocation10], %s370
        %s372 = sand.u32 %s96, 1
        %s373 = smul.addr %s372, 32
        %s374 = scalar_lea.vmem [#allocation9], %s373
        // Predicated region
        $region45: #{tpu_custom_call.1} parent=39 // pred_check
          %p375 = pneg %p109
        $region46: #{tpu_custom_call.1} parent=39 // pred_check_branch
          %377 = sbr.rel (%p375) target = $region48
        $region47: #{tpu_custom_call.1} parent=39 // pred_region
          %378 = dma.done %s371, 512
        $region48: #{tpu_custom_call.1} parent=39 // pred_fallthru
          _
        %s379 = sand.u32 %s28, 1
        %s380 = scalar_lea.sflag [#allocation10], %s379
        %s381 = sand.u32 %s126, 1
        %s382 = smul.addr %s381, 32
        %s383 = scalar_lea.vmem [#allocation11], %s382
        // Predicated region
        $region49: #{tpu_custom_call.1} parent=39 // pred_check
          %p384 = pneg %p139
        $region50: #{tpu_custom_call.1} parent=39 // pred_check_branch
          %386 = sbr.rel (%p384) target = $region52
        $region51: #{tpu_custom_call.1} parent=39 // pred_region
          %387 = dma.done %s380, 512
        $region52: #{tpu_custom_call.1} parent=39 // pred_fallthru
          _
        %s388 = sand.u32 %s158, 1
        %s389 = scalar_lea.sflag [#allocation13], %s388
        %s390 = sand.u32 %s158, 1
        %s391 = smul.addr %s390, 32
        %s392 = scalar_lea.vmem [#allocation12], %s391
        // Predicated region
        $region53: #{tpu_custom_call.1} parent=39 // pred_check
          %p393 = pneg %p171
        $region54: #{tpu_custom_call.1} parent=39 // pred_check_branch
          %395 = sbr.rel (%p393) target = $region56
        $region55: #{tpu_custom_call.1} parent=39 // pred_region
          %396 = dma.done %s389, 512
        $region56: #{tpu_custom_call.1} parent=39 // pred_fallthru
          _
        %s397 = sand.u32 %s66, 1
        %s398 = scalar_lea.sflag [#allocation7], %s397
        %s399 = sand.u32 %s66, 1
        %s400 = smul.addr %s399, 32
        %s401 = scalar_lea.vmem [#allocation6], %s400
        %p402 = pneg %p79
        %p403 = pneg %p76
        %s404 = sand.u32 %s28, 1
        %s405 = scalar_lea.sflag [#allocation10], %s404
        %s406 = sand.u32 %s96, 1
        %s407 = smul.addr %s406, 32
        %s408 = scalar_lea.vmem [#allocation9], %s407
        %p409 = pneg %p109
        %p410 = pneg %p106
        %s411 = sand.u32 %s28, 1
        %s412 = scalar_lea.sflag [#allocation10], %s411
        %s413 = sand.u32 %s126, 1
        %s414 = smul.addr %s413, 32
        %s415 = scalar_lea.vmem [#allocation11], %s414
        %p416 = pneg %p139
        %p417 = pneg %p136
        %s418 = sand.u32 %s158, 1
        %s419 = scalar_lea.sflag [#allocation13], %s418
        %s420 = sand.u32 %s158, 1
        %s421 = smul.addr %s420, 32
        %s422 = scalar_lea.vmem [#allocation12], %s421
        %p423 = pneg %p171
        %p424 = pneg %p168
        %p425 = scmp.lt.s32.totalorder %s34, 1
        %s426 = scalar_select %p425, %s34, 1
        %p427 = scmp.lt.s32.totalorder %s37, 0
        %s428 = scalar_select %p427, %s37, 0
        %s429 = sadd.s32 %s428, %s426
        %s430 = scalar_lea.vmem %s4, %s429
        %p431 = pneg %p199
        %p432 = pneg %p196
        %p433 = pneg %p229
        %p434 = pneg %p226
        %s435 = sand.u32 %s216, 1
        %s436 = scalar_lea.sflag [#allocation8], %s435
        %s437 = sand.u32 %s216, 1
        %s438 = smul.addr %s437, 32
        %s439 = scalar_lea.vmem [#allocation14], %s438
        %s440 = smul.u32 4, %s35
        %s441 = smul.u32 4, %s35
        %s442 = smul.u32 4, %s35
        %s443 = smul.u32 4, %s35
        %p444 = scmp.lt.s32.totalorder %s34, 1
        %s445 = scalar_select %p444, %s34, 1
        %p446 = scmp.lt.s32.totalorder %s37, 0
        %s447 = scalar_select %p446, %s37, 0
        %s448 = sadd.s32 %s447, %s445
        %s449 = scalar_lea.vmem %s4, %s448
        %s450 = smul.u32 4, %s35
        %p451 = scmp.eq.s32.totalorder %s37, 0
        // Predicated region
        $region57: #{tpu_custom_call.1} parent=39 // pred_check
          %p452 = pneg %p451
        $region58: #{tpu_custom_call.1} parent=39 // pred_check_branch
          %454 = sbr.rel (%p452) target = $region60
        $region59: #{tpu_custom_call.1} parent=39 // pred_region
          %vm455 = vcmask 7168
          %456 = vst.msk [vmem:[#allocation3] sm:$0xff] %vm455, -inf
          %457 = vst.msk [vmem:[#allocation3 + $0x8] sm:$0xff] %vm455, -inf
          %458 = vst.msk [vmem:[#allocation3 + $0x10] sm:$0xff] %vm455, -inf
          %459 = vst.msk [vmem:[#allocation3 + $0x18] sm:$0xff] %vm455, -inf
          %460 = vst.msk [vmem:[#allocation4] sm:$0xff] %vm455, 0.0
          %461 = vst.msk [vmem:[#allocation4 + $0x8] sm:$0xff] %vm455, 0.0
          %462 = vst.msk [vmem:[#allocation4 + $0x10] sm:$0xff] %vm455, 0.0
          %463 = vst.msk [vmem:[#allocation4 + $0x18] sm:$0xff] %vm455, 0.0
          %vm464 = vcmask 261120
          %465 = vst.msk [vmem:[#allocation5] sm:$0xff] %vm464, 0.0
          %466 = vst.msk [vmem:[#allocation5 + $0x8] sm:$0xff] %vm464, 0.0
          %467 = vst.msk [vmem:[#allocation5 + $0x10] sm:$0xff] %vm464, 0.0
          %468 = vst.msk [vmem:[#allocation5 + $0x18] sm:$0xff] %vm464, 0.0
          %v469 = vld [vmem:[%s365] sm:$0xff]
          %v470 = vld [vmem:[%s365 + $0x8] sm:$0xff]
          %v471 = vld [vmem:[%s365 + $0x10] sm:$0xff]
          %v472 = vld [vmem:[%s365 + $0x18] sm:$0xff]
          %v473 = vmul.f32 %v469, 0.17677669
          %v474 = vmul.f32 %v470, 0.17677669
          %v475 = vmul.f32 %v471, 0.17677669
          %v476 = vmul.f32 %v472, 0.17677669
          %477 = vst.msk [vmem:[#allocation2] sm:$0xff] %vm464, %v473
          %478 = vst.msk [vmem:[#allocation2 + $0x8] sm:$0xff] %vm464, %v474
          %479 = vst.msk [vmem:[#allocation2 + $0x10] sm:$0xff] %vm464, %v475
          %480 = vst.msk [vmem:[#allocation2 + $0x18] sm:$0xff] %vm464, %v476
        $region60: #{tpu_custom_call.1} parent=39 // pred_fallthru
          _
        %v481 = vld [vmem:[%s374] sm:$0xff]
        %v482 = vld [vmem:[%s374 + $0x8] sm:$0xff]
        %v483 = vld [vmem:[%s374 + $0x10] sm:$0xff]
        %v484 = vld [vmem:[%s374 + $0x18] sm:$0xff]
        %v485 = vld [vmem:[#allocation2] sm:$0xff]
        %v486 = vld [vmem:[#allocation2 + $0x8] sm:$0xff]
        %v487 = vld [vmem:[#allocation2 + $0x10] sm:$0xff]
        %v488 = vld [vmem:[#allocation2 + $0x18] sm:$0xff]
        %vm489 = vcmask 261120
        %v491 = vsel %vm489, %v485, 0
        %v494 = vsel %vm489, %v481, 0
        %496 = vmatprep.subr.mxu0 0.0
        %497 = vmatpush1.xpose.msra.mxu0 0.0
        %498 = vmatprep.subr.mxu0 0.0
        %499 = vmatpush1.xpose.msra.mxu0 0.0
        %500 = vmatprep.subr.mxu0 0.0
        %501 = vmatpush1.xpose.msra.mxu0 0.0
        %502 = vmatprep.subr.mxu0 0.0
        %503 = vmatpush1.xpose.msra.mxu0 0.0
        %504 = vmatprep.subr.mxu0 0.0
        %505 = vmatpush1.xpose.msra.mxu0 0.0
        %506 = vmatprep.subr.mxu0 0.0
        %507 = vmatpush1.xpose.msra.mxu0 0.0
        %508 = vmatprep.subr.mxu0 0.0
        %509 = vmatpush1.xpose.msra.mxu0 0.0
        %510 = vmatprep.subr.mxu0 0.0
        %511 = vmatpush1.xpose.msra.mxu0 0.0
        %512 = vmatprep.subr.mxu0 0.0
        %513 = vmatpush1.xpose.msra.mxu0 0.0
        %514 = vmatprep.subr.mxu0 0.0
        %515 = vmatpush1.xpose.msra.mxu0 0.0
        %516 = vmatprep.subr.mxu0 0.0
        %517 = vmatpush1.xpose.msra.mxu0 0.0
        %518 = vmatprep.subr.mxu0 0.0
        %519 = vmatpush1.xpose.msra.mxu0 0.0
        %520 = vmatprep.subr.mxu0 0.0
        %521 = vmatpush1.xpose.msra.mxu0 0.0
        %522 = vmatprep.subr.mxu0 0.0
        %523 = vmatpush1.xpose.msra.mxu0 0.0
        %524 = vmatprep.subr.mxu0 0.0
        %525 = vmatpush1.xpose.msra.mxu0 0.0
        %526 = vmatprep.subr.mxu0 0.0
        %527 = vmatpush1.xpose.msra.mxu0 %v494
        %528 = vmatprep.subr.mxu0 0.0
        %529 = vmatpush2.xpose.msra.mxu0 0.0
        %530 = vmatprep.subr.mxu0 0.0
        %531 = vmatpush2.xpose.msra.mxu0 0.0
        %532 = vmatprep.subr.mxu0 0.0
        %533 = vmatpush2.xpose.msra.mxu0 0.0
        %534 = vmatprep.subr.mxu0 0.0
        %535 = vmatpush2.xpose.msra.mxu0 0.0
        %536 = vmatprep.subr.mxu0 0.0
        %537 = vmatpush2.xpose.msra.mxu0 0.0
        %538 = vmatprep.subr.mxu0 0.0
        %539 = vmatpush2.xpose.msra.mxu0 0.0
        %540 = vmatprep.subr.mxu0 0.0
        %541 = vmatpush2.xpose.msra.mxu0 0.0
        %542 = vmatprep.subr.mxu0 0.0
        %543 = vmatpush2.xpose.msra.mxu0 0.0
        %544 = vmatprep.subr.mxu0 0.0
        %545 = vmatpush2.xpose.msra.mxu0 0.0
        %546 = vmatprep.subr.mxu0 0.0
        %547 = vmatpush2.xpose.msra.mxu0 0.0
        %548 = vmatprep.subr.mxu0 0.0
        %549 = vmatpush2.xpose.msra.mxu0 0.0
        %550 = vmatprep.subr.mxu0 0.0
        %551 = vmatpush2.xpose.msra.mxu0 0.0
        %552 = vmatprep.subr.mxu0 0.0
        %553 = vmatpush2.xpose.msra.mxu0 0.0
        %554 = vmatprep.subr.mxu0 0.0
        %555 = vmatpush2.xpose.msra.mxu0 0.0
        %556 = vmatprep.subr.mxu0 0.0
        %557 = vmatpush2.xpose.msra.mxu0 0.0
        %558 = vmatprep.subr.mxu0 0.0
        %559 = vmatpush2.xpose.msra.mxu0 0.0
        %560 = vmatprep.mubr.f32.mxu0 0.0
        %561 = vmatmul.mubr.f32.gmra.mxu0 %v491
        %v562 = vpop.f32.mrf.mxu0
        %v563 = vadd.f32 0.0, %v562
        %v564 = vpop.f32.mrf.mxu0
        %565 = vdwg.mxu0
        %v567 = vsel %vm489, %v486, 0
        %v570 = vsel %vm489, %v482, 0
        %572 = vmatprep.subr.mxu0 0.0
        %573 = vmatpush1.xpose.msra.mxu0 0.0
        %574 = vmatprep.subr.mxu0 0.0
        %575 = vmatpush1.xpose.msra.mxu0 0.0
        %576 = vmatprep.subr.mxu0 0.0
        %577 = vmatpush1.xpose.msra.mxu0 0.0
        %578 = vmatprep.subr.mxu0 0.0
        %579 = vmatpush1.xpose.msra.mxu0 0.0
        %580 = vmatprep.subr.mxu0 0.0
        %581 = vmatpush1.xpose.msra.mxu0 0.0
        %582 = vmatprep.subr.mxu0 0.0
        %583 = vmatpush1.xpose.msra.mxu0 0.0
        %584 = vmatprep.subr.mxu0 0.0
        %585 = vmatpush1.xpose.msra.mxu0 0.0
        %586 = vmatprep.subr.mxu0 0.0
        %587 = vmatpush1.xpose.msra.mxu0 0.0
        %588 = vmatprep.subr.mxu0 0.0
        %589 = vmatpush1.xpose.msra.mxu0 0.0
        %590 = vmatprep.subr.mxu0 0.0
        %591 = vmatpush1.xpose.msra.mxu0 0.0
        %592 = vmatprep.subr.mxu0 0.0
        %593 = vmatpush1.xpose.msra.mxu0 0.0
        %594 = vmatprep.subr.mxu0 0.0
        %595 = vmatpush1.xpose.msra.mxu0 0.0
        %596 = vmatprep.subr.mxu0 0.0
        %597 = vmatpush1.xpose.msra.mxu0 0.0
        %598 = vmatprep.subr.mxu0 0.0
        %599 = vmatpush1.xpose.msra.mxu0 0.0
        %600 = vmatprep.subr.mxu0 0.0
        %601 = vmatpush1.xpose.msra.mxu0 0.0
        %602 = vmatprep.subr.mxu0 0.0
        %603 = vmatpush1.xpose.msra.mxu0 %v570
        %604 = vmatprep.subr.mxu0 0.0
        %605 = vmatpush2.xpose.msra.mxu0 0.0
        %606 = vmatprep.subr.mxu0 0.0
        %607 = vmatpush2.xpose.msra.mxu0 0.0
        %608 = vmatprep.subr.mxu0 0.0
        %609 = vmatpush2.xpose.msra.mxu0 0.0
        %610 = vmatprep.subr.mxu0 0.0
        %611 = vmatpush2.xpose.msra.mxu0 0.0
        %612 = vmatprep.subr.mxu0 0.0
        %613 = vmatpush2.xpose.msra.mxu0 0.0
        %614 = vmatprep.subr.mxu0 0.0
        %615 = vmatpush2.xpose.msra.mxu0 0.0
        %616 = vmatprep.subr.mxu0 0.0
        %617 = vmatpush2.xpose.msra.mxu0 0.0
        %618 = vmatprep.subr.mxu0 0.0
        %619 = vmatpush2.xpose.msra.mxu0 0.0
        %620 = vmatprep.subr.mxu0 0.0
        %621 = vmatpush2.xpose.msra.mxu0 0.0
        %622 = vmatprep.subr.mxu0 0.0
        %623 = vmatpush2.xpose.msra.mxu0 0.0
        %624 = vmatprep.subr.mxu0 0.0
        %625 = vmatpush2.xpose.msra.mxu0 0.0
        %626 = vmatprep.subr.mxu0 0.0
        %627 = vmatpush2.xpose.msra.mxu0 0.0
        %628 = vmatprep.subr.mxu0 0.0
        %629 = vmatpush2.xpose.msra.mxu0 0.0
        %630 = vmatprep.subr.mxu0 0.0
        %631 = vmatpush2.xpose.msra.mxu0 0.0
        %632 = vmatprep.subr.mxu0 0.0
        %633 = vmatpush2.xpose.msra.mxu0 0.0
        %634 = vmatprep.subr.mxu0 0.0
        %635 = vmatpush2.xpose.msra.mxu0 0.0
        %636 = vmatprep.mubr.f32.mxu0 0.0
        %637 = vmatmul.mubr.f32.gmra.mxu0 %v567
        %v638 = vpop.f32.mrf.mxu0
        %v639 = vadd.f32 0.0, %v638
        %v640 = vpop.f32.mrf.mxu0
        %641 = vdwg.mxu0
        %v643 = vsel %vm489, %v487, 0
        %v646 = vsel %vm489, %v483, 0
        %648 = vmatprep.subr.mxu0 0.0
        %649 = vmatpush1.xpose.msra.mxu0 0.0
        %650 = vmatprep.subr.mxu0 0.0
        %651 = vmatpush1.xpose.msra.mxu0 0.0
        %652 = vmatprep.subr.mxu0 0.0
        %653 = vmatpush1.xpose.msra.mxu0 0.0
        %654 = vmatprep.subr.mxu0 0.0
        %655 = vmatpush1.xpose.msra.mxu0 0.0
        %656 = vmatprep.subr.mxu0 0.0
        %657 = vmatpush1.xpose.msra.mxu0 0.0
        %658 = vmatprep.subr.mxu0 0.0
        %659 = vmatpush1.xpose.msra.mxu0 0.0
        %660 = vmatprep.subr.mxu0 0.0
        %661 = vmatpush1.xpose.msra.mxu0 0.0
        %662 = vmatprep.subr.mxu0 0.0
        %663 = vmatpush1.xpose.msra.mxu0 0.0
        %664 = vmatprep.subr.mxu0 0.0
        %665 = vmatpush1.xpose.msra.mxu0 0.0
        %666 = vmatprep.subr.mxu0 0.0
        %667 = vmatpush1.xpose.msra.mxu0 0.0
        %668 = vmatprep.subr.mxu0 0.0
        %669 = vmatpush1.xpose.msra.mxu0 0.0
        %670 = vmatprep.subr.mxu0 0.0
        %671 = vmatpush1.xpose.msra.mxu0 0.0
        %672 = vmatprep.subr.mxu0 0.0
        %673 = vmatpush1.xpose.msra.mxu0 0.0
        %674 = vmatprep.subr.mxu0 0.0
        %675 = vmatpush1.xpose.msra.mxu0 0.0
        %676 = vmatprep.subr.mxu0 0.0
        %677 = vmatpush1.xpose.msra.mxu0 0.0
        %678 = vmatprep.subr.mxu0 0.0
        %679 = vmatpush1.xpose.msra.mxu0 %v646
        %680 = vmatprep.subr.mxu0 0.0
        %681 = vmatpush2.xpose.msra.mxu0 0.0
        %682 = vmatprep.subr.mxu0 0.0
        %683 = vmatpush2.xpose.msra.mxu0 0.0
        %684 = vmatprep.subr.mxu0 0.0
        %685 = vmatpush2.xpose.msra.mxu0 0.0
        %686 = vmatprep.subr.mxu0 0.0
        %687 = vmatpush2.xpose.msra.mxu0 0.0
        %688 = vmatprep.subr.mxu0 0.0
        %689 = vmatpush2.xpose.msra.mxu0 0.0
        %690 = vmatprep.subr.mxu0 0.0
        %691 = vmatpush2.xpose.msra.mxu0 0.0
        %692 = vmatprep.subr.mxu0 0.0
        %693 = vmatpush2.xpose.msra.mxu0 0.0
        %694 = vmatprep.subr.mxu0 0.0
        %695 = vmatpush2.xpose.msra.mxu0 0.0
        %696 = vmatprep.subr.mxu0 0.0
        %697 = vmatpush2.xpose.msra.mxu0 0.0
        %698 = vmatprep.subr.mxu0 0.0
        %699 = vmatpush2.xpose.msra.mxu0 0.0
        %700 = vmatprep.subr.mxu0 0.0
        %701 = vmatpush2.xpose.msra.mxu0 0.0
        %702 = vmatprep.subr.mxu0 0.0
        %703 = vmatpush2.xpose.msra.mxu0 0.0
        %704 = vmatprep.subr.mxu0 0.0
        %705 = vmatpush2.xpose.msra.mxu0 0.0
        %706 = vmatprep.subr.mxu0 0.0
        %707 = vmatpush2.xpose.msra.mxu0 0.0
        %708 = vmatprep.subr.mxu0 0.0
        %709 = vmatpush2.xpose.msra.mxu0 0.0
        %710 = vmatprep.subr.mxu0 0.0
        %711 = vmatpush2.xpose.msra.mxu0 0.0
        %712 = vmatprep.mubr.f32.mxu0 0.0
        %713 = vmatmul.mubr.f32.gmra.mxu0 %v643
        %v714 = vpop.f32.mrf.mxu0
        %v715 = vadd.f32 0.0, %v714
        %v716 = vpop.f32.mrf.mxu0
        %717 = vdwg.mxu0
        %v719 = vsel %vm489, %v488, 0
        %v722 = vsel %vm489, %v484, 0
        %724 = vmatprep.subr.mxu0 0.0
        %725 = vmatpush1.xpose.msra.mxu0 0.0
        %726 = vmatprep.subr.mxu0 0.0
        %727 = vmatpush1.xpose.msra.mxu0 0.0
        %728 = vmatprep.subr.mxu0 0.0
        %729 = vmatpush1.xpose.msra.mxu0 0.0
        %730 = vmatprep.subr.mxu0 0.0
        %731 = vmatpush1.xpose.msra.mxu0 0.0
        %732 = vmatprep.subr.mxu0 0.0
        %733 = vmatpush1.xpose.msra.mxu0 0.0
        %734 = vmatprep.subr.mxu0 0.0
        %735 = vmatpush1.xpose.msra.mxu0 0.0
        %736 = vmatprep.subr.mxu0 0.0
        %737 = vmatpush1.xpose.msra.mxu0 0.0
        %738 = vmatprep.subr.mxu0 0.0
        %739 = vmatpush1.xpose.msra.mxu0 0.0
        %740 = vmatprep.subr.mxu0 0.0
        %741 = vmatpush1.xpose.msra.mxu0 0.0
        %742 = vmatprep.subr.mxu0 0.0
        %743 = vmatpush1.xpose.msra.mxu0 0.0
        %744 = vmatprep.subr.mxu0 0.0
        %745 = vmatpush1.xpose.msra.mxu0 0.0
        %746 = vmatprep.subr.mxu0 0.0
        %747 = vmatpush1.xpose.msra.mxu0 0.0
        %748 = vmatprep.subr.mxu0 0.0
        %749 = vmatpush1.xpose.msra.mxu0 0.0
        %750 = vmatprep.subr.mxu0 0.0
        %751 = vmatpush1.xpose.msra.mxu0 0.0
        %752 = vmatprep.subr.mxu0 0.0
        %753 = vmatpush1.xpose.msra.mxu0 0.0
        %754 = vmatprep.subr.mxu0 0.0
        %755 = vmatpush1.xpose.msra.mxu0 %v722
        %756 = vmatprep.subr.mxu0 0.0
        %757 = vmatpush2.xpose.msra.mxu0 0.0
        %758 = vmatprep.subr.mxu0 0.0
        %759 = vmatpush2.xpose.msra.mxu0 0.0
        %760 = vmatprep.subr.mxu0 0.0
        %761 = vmatpush2.xpose.msra.mxu0 0.0
        %762 = vmatprep.subr.mxu0 0.0
        %763 = vmatpush2.xpose.msra.mxu0 0.0
        %764 = vmatprep.subr.mxu0 0.0
        %765 = vmatpush2.xpose.msra.mxu0 0.0
        %766 = vmatprep.subr.mxu0 0.0
        %767 = vmatpush2.xpose.msra.mxu0 0.0
        %768 = vmatprep.subr.mxu0 0.0
        %769 = vmatpush2.xpose.msra.mxu0 0.0
        %770 = vmatprep.subr.mxu0 0.0
        %771 = vmatpush2.xpose.msra.mxu0 0.0
        %772 = vmatprep.subr.mxu0 0.0
        %773 = vmatpush2.xpose.msra.mxu0 0.0
        %774 = vmatprep.subr.mxu0 0.0
        %775 = vmatpush2.xpose.msra.mxu0 0.0
        %776 = vmatprep.subr.mxu0 0.0
        %777 = vmatpush2.xpose.msra.mxu0 0.0
        %778 = vmatprep.subr.mxu0 0.0
        %779 = vmatpush2.xpose.msra.mxu0 0.0
        %780 = vmatprep.subr.mxu0 0.0
        %781 = vmatpush2.xpose.msra.mxu0 0.0
        %782 = vmatprep.subr.mxu0 0.0
        %783 = vmatpush2.xpose.msra.mxu0 0.0
        %784 = vmatprep.subr.mxu0 0.0
        %785 = vmatpush2.xpose.msra.mxu0 0.0
        %786 = vmatprep.subr.mxu0 0.0
        %787 = vmatpush2.xpose.msra.mxu0 0.0
        %788 = vmatprep.mubr.f32.mxu0 0.0
        %789 = vmatmul.mubr.f32.gmra.mxu0 %v719
        %v790 = vpop.f32.mrf.mxu0
        %v791 = vadd.f32 0.0, %v790
        %v792 = vpop.f32.mrf.mxu0
        %793 = vdwg.mxu0
        %v794 = vld [vmem:[%s392] sm:$0xff]
        %v795 = vld [vmem:[%s392 + $0x8] sm:$0xff]
        %v796 = vld [vmem:[%s392 + $0x10] sm:$0xff]
        %v797 = vld [vmem:[%s392 + $0x18] sm:$0xff]
        %v798 = vadd.f32 %v563, %v794
        %v799 = vadd.f32 %v639, %v795
        %v800 = vadd.f32 %v715, %v796
        %v801 = vadd.f32 %v791, %v797
        %v802 = vld [vmem:[%s449] sm:$0x1]
        %v804 = vlaneseq
        %v805 = vshrl.u32 %v804, 7
        %v806 = vsub.s32 0, %v805
        %v807 = vrot.slane %v802, %v806
        %v809 = vadd.f32 %v798, %v807
        %v810 = vadd.f32 %v799, %v807
        %v811 = vadd.f32 %v800, %v807
        %v812 = vadd.f32 %v801, %v807
        %v813 = vld [vmem:[#allocation3] sm:$0xff]
        %v814 = vld [vmem:[#allocation3 + $0x8] sm:$0xff]
        %v815 = vld [vmem:[#allocation3 + $0x10] sm:$0xff]
        %v816 = vld [vmem:[#allocation3 + $0x18] sm:$0xff]
        %vm817 = vcmask 64512
        %v818 = vsel %vm817, %v809, -inf
        %819 = vmax.xlane.f32.xlu0 %v818
        %v820 = vpop.xlane.xlu0 %819
        %v821 = vsel %vm817, %v810, -inf
        %822 = vmax.xlane.f32.xlu0 %v821
        %v823 = vpop.xlane.xlu0 %822
        %v824 = vsel %vm817, %v811, -inf
        %825 = vmax.xlane.f32.xlu0 %v824
        %v826 = vpop.xlane.xlu0 %825
        %v827 = vsel %vm817, %v812, -inf
        %828 = vmax.xlane.f32.xlu0 %v827
        %v829 = vpop.xlane.xlu0 %828
        %v830 = vmax.f32 %v813, %v820
        %v831 = vmax.f32 %v814, %v823
        %v832 = vmax.f32 %v815, %v826
        %v833 = vmax.f32 %v816, %v829
        %v834 = vsub.f32 %v813, %v830
        %v835 = vsub.f32 %v814, %v831
        %v836 = vsub.f32 %v815, %v832
        %v837 = vsub.f32 %v816, %v833
        %v838 = vmul.f32 %v834, 1.442695
        %v839 = vpow.pop %v838
        %v840 = vmul.f32 %v835, 1.442695
        %v841 = vpow.pop %v840
        %v842 = vmul.f32 %v836, 1.442695
        %v843 = vpow.pop %v842
        %v844 = vmul.f32 %v837, 1.442695
        %v845 = vpow.pop %v844
        %847 = vset.pattern.permute.xlu0 0
        %848 = vperm.xlu0 %847, %v830
        %v849 = vpop.permute.xlu0 %848
        %852 = vset.pattern.permute.xlu0 0
        %853 = vperm.xlu0 %852, %v831
        %v854 = vpop.permute.xlu0 %853
        %857 = vset.pattern.permute.xlu0 0
        %858 = vperm.xlu0 %857, %v832
        %v859 = vpop.permute.xlu0 %858
        %862 = vset.pattern.permute.xlu0 0
        %863 = vperm.xlu0 %862, %v833
        %v864 = vpop.permute.xlu0 %863
        %v866 = vsub.f32 %v809, %v849
        %v867 = vsub.f32 %v810, %v854
        %v868 = vsub.f32 %v811, %v859
        %v869 = vsub.f32 %v812, %v864
        %v870 = vmul.f32 %v866, 1.442695
        %v871 = vpow.pop %v870
        %v872 = vmul.f32 %v867, 1.442695
        %v873 = vpow.pop %v872
        %v874 = vmul.f32 %v868, 1.442695
        %v875 = vpow.pop %v874
        %v876 = vmul.f32 %v869, 1.442695
        %v877 = vpow.pop %v876
        %v878 = vld [vmem:[#allocation4] sm:$0xff]
        %v879 = vld [vmem:[#allocation4 + $0x8] sm:$0xff]
        %v880 = vld [vmem:[#allocation4 + $0x10] sm:$0xff]
        %v881 = vld [vmem:[#allocation4 + $0x18] sm:$0xff]
        %v882 = vmul.f32 %v839, %v878
        %v883 = vmul.f32 %v841, %v879
        %v884 = vmul.f32 %v843, %v880
        %v885 = vmul.f32 %v845, %v881
        %v886 = vsel %vm817, %v871, 0.0
        %887 = vadd.xlane.f32.xlu0 %v886
        %v888 = vpop.xlane.xlu0 %887
        %v889 = vsel %vm817, %v873, 0.0
        %890 = vadd.xlane.f32.xlu0 %v889
        %v891 = vpop.xlane.xlu0 %890
        %v892 = vsel %vm817, %v875, 0.0
        %893 = vadd.xlane.f32.xlu0 %v892
        %v894 = vpop.xlane.xlu0 %893
        %v895 = vsel %vm817, %v877, 0.0
        %896 = vadd.xlane.f32.xlu0 %v895
        %v897 = vpop.xlane.xlu0 %896
        %v898 = vadd.f32 %v882, %v888
        %v899 = vadd.f32 %v883, %v891
        %v900 = vadd.f32 %v884, %v894
        %v901 = vadd.f32 %v885, %v897
        %vm902 = vcmask 7168
        %903 = vst.msk [vmem:[#allocation4] sm:$0xff] %vm902, %v898
        %904 = vst.msk [vmem:[#allocation4 + $0x8] sm:$0xff] %vm902, %v899
        %905 = vst.msk [vmem:[#allocation4 + $0x10] sm:$0xff] %vm902, %v900
        %906 = vst.msk [vmem:[#allocation4 + $0x18] sm:$0xff] %vm902, %v901
        %v907 = vld [vmem:[%s383] sm:$0xff]
        %v908 = vld [vmem:[%s383 + $0x8] sm:$0xff]
        %v909 = vld [vmem:[%s383 + $0x10] sm:$0xff]
        %v910 = vld [vmem:[%s383 + $0x18] sm:$0xff]
        %v912 = vsel %vm817, %v871, 0
        %914 = vmatprep.subr.mxu0 0.0
        %915 = vmatpush1.msra.mxu0 0.0
        %916 = vmatprep.subr.mxu0 0.0
        %917 = vmatpush1.msra.mxu0 0.0
        %918 = vmatprep.subr.mxu0 0.0
        %919 = vmatpush1.msra.mxu0 0.0
        %920 = vmatprep.subr.mxu0 0.0
        %921 = vmatpush1.msra.mxu0 0.0
        %922 = vmatprep.subr.mxu0 0.0
        %923 = vmatpush1.msra.mxu0 0.0
        %924 = vmatprep.subr.mxu0 0.0
        %925 = vmatpush1.msra.mxu0 0.0
        %926 = vmatprep.subr.mxu0 0.0
        %927 = vmatpush1.msra.mxu0 0.0
        %928 = vmatprep.subr.mxu0 0.0
        %929 = vmatpush1.msra.mxu0 0.0
        %930 = vmatprep.subr.mxu0 0.0
        %931 = vmatpush1.msra.mxu0 0.0
        %932 = vmatprep.subr.mxu0 0.0
        %933 = vmatpush1.msra.mxu0 0.0
        %934 = vmatprep.subr.mxu0 0.0
        %935 = vmatpush1.msra.mxu0 0.0
        %936 = vmatprep.subr.mxu0 0.0
        %937 = vmatpush1.msra.mxu0 0.0
        %938 = vmatprep.subr.mxu0 0.0
        %939 = vmatpush1.msra.mxu0 0.0
        %940 = vmatprep.subr.mxu0 0.0
        %941 = vmatpush1.msra.mxu0 0.0
        %942 = vmatprep.subr.mxu0 0.0
        %943 = vmatpush1.msra.mxu0 0.0
        %944 = vmatprep.subr.mxu0 0.0
        %945 = vmatpush1.msra.mxu0 %v907
        %946 = vmatprep.subr.mxu0 0.0
        %947 = vmatpush2.msra.mxu0 0.0
        %948 = vmatprep.subr.mxu0 0.0
        %949 = vmatpush2.msra.mxu0 0.0
        %950 = vmatprep.subr.mxu0 0.0
        %951 = vmatpush2.msra.mxu0 0.0
        %952 = vmatprep.subr.mxu0 0.0
        %953 = vmatpush2.msra.mxu0 0.0
        %954 = vmatprep.subr.mxu0 0.0
        %955 = vmatpush2.msra.mxu0 0.0
        %956 = vmatprep.subr.mxu0 0.0
        %957 = vmatpush2.msra.mxu0 0.0
        %958 = vmatprep.subr.mxu0 0.0
        %959 = vmatpush2.msra.mxu0 0.0
        %960 = vmatprep.subr.mxu0 0.0
        %961 = vmatpush2.msra.mxu0 0.0
        %962 = vmatprep.subr.mxu0 0.0
        %963 = vmatpush2.msra.mxu0 0.0
        %964 = vmatprep.subr.mxu0 0.0
        %965 = vmatpush2.msra.mxu0 0.0
        %966 = vmatprep.subr.mxu0 0.0
        %967 = vmatpush2.msra.mxu0 0.0
        %968 = vmatprep.subr.mxu0 0.0
        %969 = vmatpush2.msra.mxu0 0.0
        %970 = vmatprep.subr.mxu0 0.0
        %971 = vmatpush2.msra.mxu0 0.0
        %972 = vmatprep.subr.mxu0 0.0
        %973 = vmatpush2.msra.mxu0 0.0
        %974 = vmatprep.subr.mxu0 0.0
        %975 = vmatpush2.msra.mxu0 0.0
        %976 = vmatprep.subr.mxu0 0.0
        %977 = vmatpush2.msra.mxu0 0.0
        %978 = vmatprep.mubr.f32.mxu0 0.0
        %979 = vmatmul.mubr.f32.gmra.mxu0 %v912
        %v980 = vpop.f32.mrf.mxu0
        %v981 = vadd.f32 0.0, %v980
        %v982 = vpop.f32.mrf.mxu0
        %983 = vdwg.mxu0
        %v985 = vsel %vm817, %v873, 0
        %987 = vmatprep.subr.mxu0 0.0
        %988 = vmatpush1.msra.mxu0 0.0
        %989 = vmatprep.subr.mxu0 0.0
        %990 = vmatpush1.msra.mxu0 0.0
        %991 = vmatprep.subr.mxu0 0.0
        %992 = vmatpush1.msra.mxu0 0.0
        %993 = vmatprep.subr.mxu0 0.0
        %994 = vmatpush1.msra.mxu0 0.0
        %995 = vmatprep.subr.mxu0 0.0
        %996 = vmatpush1.msra.mxu0 0.0
        %997 = vmatprep.subr.mxu0 0.0
        %998 = vmatpush1.msra.mxu0 0.0
        %999 = vmatprep.subr.mxu0 0.0
        %1000 = vmatpush1.msra.mxu0 0.0
        %1001 = vmatprep.subr.mxu0 0.0
        %1002 = vmatpush1.msra.mxu0 0.0
        %1003 = vmatprep.subr.mxu0 0.0
        %1004 = vmatpush1.msra.mxu0 0.0
        %1005 = vmatprep.subr.mxu0 0.0
        %1006 = vmatpush1.msra.mxu0 0.0
        %1007 = vmatprep.subr.mxu0 0.0
        %1008 = vmatpush1.msra.mxu0 0.0
        %1009 = vmatprep.subr.mxu0 0.0
        %1010 = vmatpush1.msra.mxu0 0.0
        %1011 = vmatprep.subr.mxu0 0.0
        %1012 = vmatpush1.msra.mxu0 0.0
        %1013 = vmatprep.subr.mxu0 0.0
        %1014 = vmatpush1.msra.mxu0 0.0
        %1015 = vmatprep.subr.mxu0 0.0
        %1016 = vmatpush1.msra.mxu0 0.0
        %1017 = vmatprep.subr.mxu0 0.0
        %1018 = vmatpush1.msra.mxu0 %v908
        %1019 = vmatprep.subr.mxu0 0.0
        %1020 = vmatpush2.msra.mxu0 0.0
        %1021 = vmatprep.subr.mxu0 0.0
        %1022 = vmatpush2.msra.mxu0 0.0
        %1023 = vmatprep.subr.mxu0 0.0
        %1024 = vmatpush2.msra.mxu0 0.0
        %1025 = vmatprep.subr.mxu0 0.0
        %1026 = vmatpush2.msra.mxu0 0.0
        %1027 = vmatprep.subr.mxu0 0.0
        %1028 = vmatpush2.msra.mxu0 0.0
        %1029 = vmatprep.subr.mxu0 0.0
        %1030 = vmatpush2.msra.mxu0 0.0
        %1031 = vmatprep.subr.mxu0 0.0
        %1032 = vmatpush2.msra.mxu0 0.0
        %1033 = vmatprep.subr.mxu0 0.0
        %1034 = vmatpush2.msra.mxu0 0.0
        %1035 = vmatprep.subr.mxu0 0.0
        %1036 = vmatpush2.msra.mxu0 0.0
        %1037 = vmatprep.subr.mxu0 0.0
        %1038 = vmatpush2.msra.mxu0 0.0
        %1039 = vmatprep.subr.mxu0 0.0
        %1040 = vmatpush2.msra.mxu0 0.0
        %1041 = vmatprep.subr.mxu0 0.0
        %1042 = vmatpush2.msra.mxu0 0.0
        %1043 = vmatprep.subr.mxu0 0.0
        %1044 = vmatpush2.msra.mxu0 0.0
        %1045 = vmatprep.subr.mxu0 0.0
        %1046 = vmatpush2.msra.mxu0 0.0
        %1047 = vmatprep.subr.mxu0 0.0
        %1048 = vmatpush2.msra.mxu0 0.0
        %1049 = vmatprep.subr.mxu0 0.0
        %1050 = vmatpush2.msra.mxu0 0.0
        %1051 = vmatprep.mubr.f32.mxu0 0.0
        %1052 = vmatmul.mubr.f32.gmra.mxu0 %v985
        %v1053 = vpop.f32.mrf.mxu0
        %v1054 = vadd.f32 0.0, %v1053
        %v1055 = vpop.f32.mrf.mxu0
        %1056 = vdwg.mxu0
        %v1058 = vsel %vm817, %v875, 0
        %1060 = vmatprep.subr.mxu0 0.0
        %1061 = vmatpush1.msra.mxu0 0.0
        %1062 = vmatprep.subr.mxu0 0.0
        %1063 = vmatpush1.msra.mxu0 0.0
        %1064 = vmatprep.subr.mxu0 0.0
        %1065 = vmatpush1.msra.mxu0 0.0
        %1066 = vmatprep.subr.mxu0 0.0
        %1067 = vmatpush1.msra.mxu0 0.0
        %1068 = vmatprep.subr.mxu0 0.0
        %1069 = vmatpush1.msra.mxu0 0.0
        %1070 = vmatprep.subr.mxu0 0.0
        %1071 = vmatpush1.msra.mxu0 0.0
        %1072 = vmatprep.subr.mxu0 0.0
        %1073 = vmatpush1.msra.mxu0 0.0
        %1074 = vmatprep.subr.mxu0 0.0
        %1075 = vmatpush1.msra.mxu0 0.0
        %1076 = vmatprep.subr.mxu0 0.0
        %1077 = vmatpush1.msra.mxu0 0.0
        %1078 = vmatprep.subr.mxu0 0.0
        %1079 = vmatpush1.msra.mxu0 0.0
        %1080 = vmatprep.subr.mxu0 0.0
        %1081 = vmatpush1.msra.mxu0 0.0
        %1082 = vmatprep.subr.mxu0 0.0
        %1083 = vmatpush1.msra.mxu0 0.0
        %1084 = vmatprep.subr.mxu0 0.0
        %1085 = vmatpush1.msra.mxu0 0.0
        %1086 = vmatprep.subr.mxu0 0.0
        %1087 = vmatpush1.msra.mxu0 0.0
        %1088 = vmatprep.subr.mxu0 0.0
        %1089 = vmatpush1.msra.mxu0 0.0
        %1090 = vmatprep.subr.mxu0 0.0
        %1091 = vmatpush1.msra.mxu0 %v909
        %1092 = vmatprep.subr.mxu0 0.0
        %1093 = vmatpush2.msra.mxu0 0.0
        %1094 = vmatprep.subr.mxu0 0.0
        %1095 = vmatpush2.msra.mxu0 0.0
        %1096 = vmatprep.subr.mxu0 0.0
        %1097 = vmatpush2.msra.mxu0 0.0
        %1098 = vmatprep.subr.mxu0 0.0
        %1099 = vmatpush2.msra.mxu0 0.0
        %1100 = vmatprep.subr.mxu0 0.0
        %1101 = vmatpush2.msra.mxu0 0.0
        %1102 = vmatprep.subr.mxu0 0.0
        %1103 = vmatpush2.msra.mxu0 0.0
        %1104 = vmatprep.subr.mxu0 0.0
        %1105 = vmatpush2.msra.mxu0 0.0
        %1106 = vmatprep.subr.mxu0 0.0
        %1107 = vmatpush2.msra.mxu0 0.0
        %1108 = vmatprep.subr.mxu0 0.0
        %1109 = vmatpush2.msra.mxu0 0.0
        %1110 = vmatprep.subr.mxu0 0.0
        %1111 = vmatpush2.msra.mxu0 0.0
        %1112 = vmatprep.subr.mxu0 0.0
        %1113 = vmatpush2.msra.mxu0 0.0
        %1114 = vmatprep.subr.mxu0 0.0
        %1115 = vmatpush2.msra.mxu0 0.0
        %1116 = vmatprep.subr.mxu0 0.0
        %1117 = vmatpush2.msra.mxu0 0.0
        %1118 = vmatprep.subr.mxu0 0.0
        %1119 = vmatpush2.msra.mxu0 0.0
        %1120 = vmatprep.subr.mxu0 0.0
        %1121 = vmatpush2.msra.mxu0 0.0
        %1122 = vmatprep.subr.mxu0 0.0
        %1123 = vmatpush2.msra.mxu0 0.0
        %1124 = vmatprep.mubr.f32.mxu0 0.0
        %1125 = vmatmul.mubr.f32.gmra.mxu0 %v1058
        %v1126 = vpop.f32.mrf.mxu0
        %v1127 = vadd.f32 0.0, %v1126
        %v1128 = vpop.f32.mrf.mxu0
        %1129 = vdwg.mxu0
        %v1131 = vsel %vm817, %v877, 0
        %1133 = vmatprep.subr.mxu0 0.0
        %1134 = vmatpush1.msra.mxu0 0.0
        %1135 = vmatprep.subr.mxu0 0.0
        %1136 = vmatpush1.msra.mxu0 0.0
        %1137 = vmatprep.subr.mxu0 0.0
        %1138 = vmatpush1.msra.mxu0 0.0
        %1139 = vmatprep.subr.mxu0 0.0
        %1140 = vmatpush1.msra.mxu0 0.0
        %1141 = vmatprep.subr.mxu0 0.0
        %1142 = vmatpush1.msra.mxu0 0.0
        %1143 = vmatprep.subr.mxu0 0.0
        %1144 = vmatpush1.msra.mxu0 0.0
        %1145 = vmatprep.subr.mxu0 0.0
        %1146 = vmatpush1.msra.mxu0 0.0
        %1147 = vmatprep.subr.mxu0 0.0
        %1148 = vmatpush1.msra.mxu0 0.0
        %1149 = vmatprep.subr.mxu0 0.0
        %1150 = vmatpush1.msra.mxu0 0.0
        %1151 = vmatprep.subr.mxu0 0.0
        %1152 = vmatpush1.msra.mxu0 0.0
        %1153 = vmatprep.subr.mxu0 0.0
        %1154 = vmatpush1.msra.mxu0 0.0
        %1155 = vmatprep.subr.mxu0 0.0
        %1156 = vmatpush1.msra.mxu0 0.0
        %1157 = vmatprep.subr.mxu0 0.0
        %1158 = vmatpush1.msra.mxu0 0.0
        %1159 = vmatprep.subr.mxu0 0.0
        %1160 = vmatpush1.msra.mxu0 0.0
        %1161 = vmatprep.subr.mxu0 0.0
        %1162 = vmatpush1.msra.mxu0 0.0
        %1163 = vmatprep.subr.mxu0 0.0
        %1164 = vmatpush1.msra.mxu0 %v910
        %1165 = vmatprep.subr.mxu0 0.0
        %1166 = vmatpush2.msra.mxu0 0.0
        %1167 = vmatprep.subr.mxu0 0.0
        %1168 = vmatpush2.msra.mxu0 0.0
        %1169 = vmatprep.subr.mxu0 0.0
        %1170 = vmatpush2.msra.mxu0 0.0
        %1171 = vmatprep.subr.mxu0 0.0
        %1172 = vmatpush2.msra.mxu0 0.0
        %1173 = vmatprep.subr.mxu0 0.0
        %1174 = vmatpush2.msra.mxu0 0.0
        %1175 = vmatprep.subr.mxu0 0.0
        %1176 = vmatpush2.msra.mxu0 0.0
        %1177 = vmatprep.subr.mxu0 0.0
        %1178 = vmatpush2.msra.mxu0 0.0
        %1179 = vmatprep.subr.mxu0 0.0
        %1180 = vmatpush2.msra.mxu0 0.0
        %1181 = vmatprep.subr.mxu0 0.0
        %1182 = vmatpush2.msra.mxu0 0.0
        %1183 = vmatprep.subr.mxu0 0.0
        %1184 = vmatpush2.msra.mxu0 0.0
        %1185 = vmatprep.subr.mxu0 0.0
        %1186 = vmatpush2.msra.mxu0 0.0
        %1187 = vmatprep.subr.mxu0 0.0
        %1188 = vmatpush2.msra.mxu0 0.0
        %1189 = vmatprep.subr.mxu0 0.0
        %1190 = vmatpush2.msra.mxu0 0.0
        %1191 = vmatprep.subr.mxu0 0.0
        %1192 = vmatpush2.msra.mxu0 0.0
        %1193 = vmatprep.subr.mxu0 0.0
        %1194 = vmatpush2.msra.mxu0 0.0
        %1195 = vmatprep.subr.mxu0 0.0
        %1196 = vmatpush2.msra.mxu0 0.0
        %1197 = vmatprep.mubr.f32.mxu0 0.0
        %1198 = vmatmul.mubr.f32.gmra.mxu0 %v1131
        %v1199 = vpop.f32.mrf.mxu0
        %v1200 = vadd.f32 0.0, %v1199
        %v1201 = vpop.f32.mrf.mxu0
        %1202 = vdwg.mxu0
        %v1203 = vld [vmem:[#allocation5] sm:$0xff]
        %v1204 = vld [vmem:[#allocation5 + $0x8] sm:$0xff]
        %v1205 = vld [vmem:[#allocation5 + $0x10] sm:$0xff]
        %v1206 = vld [vmem:[#allocation5 + $0x18] sm:$0xff]
        %1208 = vset.pattern.permute.xlu0 0
        %1209 = vperm.xlu0 %1208, %v839
        %v1210 = vpop.permute.xlu0 %1209
        %1213 = vset.pattern.permute.xlu0 0
        %1214 = vperm.xlu0 %1213, %v841
        %v1215 = vpop.permute.xlu0 %1214
        %1218 = vset.pattern.permute.xlu0 0
        %1219 = vperm.xlu0 %1218, %v843
        %v1220 = vpop.permute.xlu0 %1219
        %1223 = vset.pattern.permute.xlu0 0
        %1224 = vperm.xlu0 %1223, %v845
        %v1225 = vpop.permute.xlu0 %1224
        %v1227 = vmul.f32 %v1210, %v1203
        %v1228 = vmul.f32 %v1215, %v1204
        %v1229 = vmul.f32 %v1220, %v1205
        %v1230 = vmul.f32 %v1225, %v1206
        %v1231 = vadd.f32 %v1227, %v981
        %v1232 = vadd.f32 %v1228, %v1054
        %v1233 = vadd.f32 %v1229, %v1127
        %v1234 = vadd.f32 %v1230, %v1200
        %1235 = vst.msk [vmem:[#allocation5] sm:$0xff] %vm489, %v1231
        %1236 = vst.msk [vmem:[#allocation5 + $0x8] sm:$0xff] %vm489, %v1232
        %1237 = vst.msk [vmem:[#allocation5 + $0x10] sm:$0xff] %vm489, %v1233
        %1238 = vst.msk [vmem:[#allocation5 + $0x18] sm:$0xff] %vm489, %v1234
        %1239 = vst.msk [vmem:[#allocation3] sm:$0xff] %vm902, %v830
        %1240 = vst.msk [vmem:[#allocation3 + $0x8] sm:$0xff] %vm902, %v831
        %1241 = vst.msk [vmem:[#allocation3 + $0x10] sm:$0xff] %vm902, %v832
        %1242 = vst.msk [vmem:[#allocation3 + $0x18] sm:$0xff] %vm902, %v833
        // Predicated region
        $region61: #{tpu_custom_call.1} parent=39 // pred_check
          %p1243 = pneg %p451
        $region62: #{tpu_custom_call.1} parent=39 // pred_check_branch
          %1245 = sbr.rel (%p1243) target = $region64
        $region63: #{tpu_custom_call.1} parent=39 // pred_region
          %v1246 = vld [vmem:[#allocation4] sm:$0xff]
          %v1247 = vld [vmem:[#allocation4 + $0x8] sm:$0xff]
          %v1248 = vld [vmem:[#allocation4 + $0x10] sm:$0xff]
          %v1249 = vld [vmem:[#allocation4 + $0x18] sm:$0xff]
          %v1250 = vrcp.pop %v1246
          %v1251 = vmul.f32 1.0, %v1250
          %v1252 = vrcp.pop %v1247
          %v1253 = vmul.f32 1.0, %v1252
          %v1254 = vrcp.pop %v1248
          %v1255 = vmul.f32 1.0, %v1254
          %v1256 = vrcp.pop %v1249
          %v1257 = vmul.f32 1.0, %v1256
          %v1258 = vld [vmem:[#allocation5] sm:$0xff]
          %v1259 = vld [vmem:[#allocation5 + $0x8] sm:$0xff]
          %v1260 = vld [vmem:[#allocation5 + $0x10] sm:$0xff]
          %v1261 = vld [vmem:[#allocation5 + $0x18] sm:$0xff]
          %1263 = vset.pattern.permute.xlu0 0
          %1264 = vperm.xlu0 %1263, %v1251
          %v1265 = vpop.permute.xlu0 %1264
          %1268 = vset.pattern.permute.xlu0 0
          %1269 = vperm.xlu0 %1268, %v1253
          %v1270 = vpop.permute.xlu0 %1269
          %1273 = vset.pattern.permute.xlu0 0
          %1274 = vperm.xlu0 %1273, %v1255
          %v1275 = vpop.permute.xlu0 %1274
          %1278 = vset.pattern.permute.xlu0 0
          %1279 = vperm.xlu0 %1278, %v1257
          %v1280 = vpop.permute.xlu0 %1279
          %v1282 = vmul.f32 %v1258, %v1265
          %v1283 = vmul.f32 %v1259, %v1270
          %v1284 = vmul.f32 %v1260, %v1275
          %v1285 = vmul.f32 %v1261, %v1280
          %1286 = vst.msk [vmem:[%s439] sm:$0xff] %vm489, %v1282
          %1287 = vst.msk [vmem:[%s439 + $0x8] sm:$0xff] %vm489, %v1283
          %1288 = vst.msk [vmem:[%s439 + $0x10] sm:$0xff] %vm489, %v1284
          %1289 = vst.msk [vmem:[%s439 + $0x18] sm:$0xff] %vm489, %v1285
        $region64: #{tpu_custom_call.1} parent=39 // pred_fallthru
          _
        %s1290 = sand.u32 %s216, 1
        %s1291 = scalar_lea.sflag [#allocation8], %s1290
        %s1292 = sand.u32 %s216, 1
        %s1293 = smul.addr %s1292, 32
        %s1294 = scalar_lea.vmem [#allocation14], %s1293
        // Predicated region
        $region65: #{tpu_custom_call.1} parent=39 // pred_check
          %p1295 = pneg %p226
        $region66: #{tpu_custom_call.1} parent=39 // pred_check_branch
          %1297 = sbr.rel (%p1295) target = $region68
        $region67: #{tpu_custom_call.1} parent=39 // pred_region
          %s1298 = smul.u32 4, %s35
          %s1300 = ssub.s32 512, 512
          %1301 = vsyncadd %s1291, %s1300
          %s1302 = sadd.s32 %s36, %s1298
          %s1303 = smul.addr %s34, 4
          %s1304 = sadd.s32 %s1302, %s1303
          %s1305 = smul.addr %s1304, 128
          %s1306 = scalar_lea.hbm %s5, %s1305
          %s1307 = sshll.u32 %s1294, 4
          %s1308 = int_to_ptr.vmem [resolvable:$true] %s1307
          %1313 = dma.vmem_to_hbm [thread:$0]  %s1308, 512, %s1306, %s1291, 128, 128, 8
        $region68: #{tpu_custom_call.1} parent=39 // pred_fallthru
          _
      $region40: #{tpu_custom_call.1} parent=5 // pred_fallthru
        _
      %p1314 = scmp.le.s32.totalorder 2, %s23
      // Predicated region
      $region69: #{tpu_custom_call.1} parent=5 // pred_check
        %p1315 = pneg %p1314
      $region70: #{tpu_custom_call.1} parent=5 // pred_check_branch
        %1317 = sbr.rel (%p1315) target = $region72
      $region71: #{tpu_custom_call.1} parent=5 // pred_region
        %s1318 = ssub.s32 %s23, 2
        // Predicated region
        $region73: #{tpu_custom_call.1} parent=71 // pred_check
          %p1319 = pneg %p232
        $region74: #{tpu_custom_call.1} parent=71 // pred_check_branch
          %1321 = sbr.rel (%p1319) target = $region76
        $region75: #{tpu_custom_call.1} parent=71 // pred_region
          %s1322 = sand.u32 %s217, 1
          %s1323 = scalar_lea.sflag [#allocation8], %s1322
          %s1324 = sand.u32 %s217, 1
          %s1325 = smul.addr %s1324, 32
          %s1326 = scalar_lea.vmem [#allocation14], %s1325
          %1327 = dma.done %s1323, 512
        $region76: #{tpu_custom_call.1} parent=71 // pred_fallthru
          _
      $region72: #{tpu_custom_call.1} parent=5 // pred_fallthru
        _
    $region6: #{tpu_custom_call.1} parent=1 // loop_footer
      %s27 = sadd.s32 1, %s23
    $region7: #{tpu_custom_call.1} parent=1 // loop_footer_branch
      %22 = sbr.rel target = $region3
    $region8: #{tpu_custom_call.1} parent=1 // loop_exit
      _
    %1328 = vsyncpa [#allocation7], 1
    %s1329 = scalar_lea.sflag [#allocation7], 1
    %1330 = vsyncpa %s1329, 1
    %1331 = vsyncpa [#allocation10], 1
    %s1332 = scalar_lea.sflag [#allocation10], 1
    %1333 = vsyncpa %s1332, 1
    %1334 = vsyncpa [#allocation13], 1
    %s1335 = scalar_lea.sflag [#allocation13], 1
    %1336 = vsyncpa %s1335, 1
    %1337 = vsyncpa [#allocation8], 1
    %s1338 = scalar_lea.sflag [#allocation8], 1
    %1339 = vsyncpa %s1338, 1

</llo_original>
